<compile_context>
chip_gen: v7x
topology: tpu7x:2x2x1
jax: 0.10.0
libtpu: 0.0.40
codegen_flags: <defaults>
</compile_context>

<pallas_src>
import functools

import jax
import jax.numpy as jnp
import numpy as np
from jax.experimental import pallas as pl
from jax.experimental.pallas import tpu as pltpu


def _param_count(latent_dim, num_hidden):
    L, H = latent_dim, num_hidden
    return H * (L + 1) + H * (H + 1) + L * (H + 1)


# ----------------------------------------------------------------------------
# In-kernel helpers
# ----------------------------------------------------------------------------
def _load_layer_slabs(p_ref, latent_dim, num_hidden):
    """Slice the flat (P, TB) param tile into three per-layer slabs
    (weights followed by bias, contiguous rows) and upcast to f32 once.
    Layer boundaries (0, H*(L+1), +H*(H+1)) are 16-row aligned for the demo
    config, so the slices are also clean for sublane-packed bf16 params."""
    L, H = latent_dim, num_hidden
    n1 = H * (L + 1)          # w1 (H*L) + b1 (H)
    n2 = H * (H + 1)          # w2 (H*H) + b2 (H)
    n3 = L * (H + 1)          # w3 (L*H) + b3 (L)
    s1 = p_ref[0:n1, :].astype(jnp.float32)
    s2 = p_ref[n1:n1 + n2, :].astype(jnp.float32)
    s3 = p_ref[n1 + n2:n1 + n2 + n3, :].astype(jnp.float32)
    return s1, s2, s3


def _affine(slab, h_in, h_out, x, in_major):
    """Per-sample affine layer, batch on lanes.

    slab : (h_in*h_out + h_out, TB) f32 -- flat weights then bias, one column
           per sample.
    x    : (h_in, TB) f32.
    Returns (h_out, TB) f32 = W @ x + b, independently per lane (sample).
    """
    n_w = h_in * h_out
    b = slab[n_w:n_w + h_out, :]
    if in_major:
        # Row index = in * h_out + out: each contraction step reads a
        # contiguous (h_out, TB) slab -> pure VPU multiply-accumulate.
        acc = b
        for j in range(h_in):
            acc = acc + slab[j * h_out:(j + 1) * h_out, :] * x[j:j + 1, :]
        return acc
    # torch order (self.params layout): row index = out * h_in + in.
    tb = slab.shape[-1]
    w = slab[:n_w, :].reshape(h_out, h_in, tb)
    return jnp.sum(w * x[None, :, :], axis=1) + b


def _mlp(slabs, z, latent_dim, num_hidden, in_major):
    L, H = latent_dim, num_hidden
    s1, s2, s3 = slabs
    h = jnp.tanh(_affine(s1, L, H, z, in_major))
    h = jnp.tanh(_affine(s2, H, H, h, in_major))
    return jnp.tanh(_affine(s3, H, L, h, in_major))


# ----------------------------------------------------------------------------
# Kernels
# ----------------------------------------------------------------------------
def _ode_fwd_kernel(z_ref, p_ref, out_ref, *, latent_dim, num_hidden, in_major):
    slabs = _load_layer_slabs(p_ref, latent_dim, num_hidden)
    z = z_ref[...].astype(jnp.float32)
    out = _mlp(slabs, z, latent_dim, num_hidden, in_major)
    out_ref[...] = out.astype(out_ref.dtype)


def _ode_euler_kernel(z_ref, p_ref, out_ref, *, latent_dim, num_hidden,
                      in_major, n_steps, dt):
    # Fused explicit-Euler integrator: params are DMA'd and upcast once per
    # batch tile and reused for every RHS evaluation.
    slabs = _load_layer_slabs(p_ref, latent_dim, num_hidden)
    z = z_ref[...].astype(jnp.float32)
    for _ in range(n_steps):
        z = z + dt * _mlp(slabs, z, latent_dim, num_hidden, in_major)
    out_ref[...] = z.astype(out_ref.dtype)


# ----------------------------------------------------------------------------
# pallas_call wrappers (feature-major: z_t (L, B), params_t (P, B))
# ----------------------------------------------------------------------------
def _pick_tb(batch, block_b):
    """Lane-aligned batch tile; guarantees >= 2 grid blocks when B > 128 so
    both TensorCores get work on v7x (dimension_semantics=('parallel',))."""
    if batch <= 128:
        return batch
    half = -(-batch // 2)
    half_up = ((half + 127) // 128) * 128
    return max(128, min(block_b, half_up))


def _run(kernel, z_t, params_t, block_b):
    L, B = z_t.shape
    P, B2 = params_t.shape
    assert B == B2
    tb = _pick_tb(B, block_b)
    grid = (pl.cdiv(B, tb),)
    return pl.pallas_call(
        kernel,
        out_shape=jax.ShapeDtypeStruct((L, B), z_t.dtype),
        grid=grid,
        in_specs=[
            pl.BlockSpec((L, tb), lambda i: (0, i)),   # state, batch on lanes
            pl.BlockSpec((P, tb), lambda i: (0, i)),   # flat per-sample params
        ],
        out_specs=pl.BlockSpec((L, tb), lambda i: (0, i)),
        compiler_params=pltpu.CompilerParams(
            dimension_semantics=("parallel",)),
    )(z_t, params_t)


@functools.partial(jax.jit,
                   static_argnames=("num_hidden", "in_major", "block_b"))
def ode_forward_t(t, z_t, params_t, *, num_hidden, in_major=False,
                  block_b=512):
    """forward(t, z) with feature-major inputs: z_t (L, B), params_t (P, B)."""
    del t  # unused by the dynamics network (matches the PyTorch module)
    L, _ = z_t.shape
    P, _ = params_t.shape
    assert P == _param_count(L, num_hidden)
    kernel = functools.partial(_ode_fwd_kernel, latent_dim=L,
                               num_hidden=num_hidden, in_major=in_major)
    return _run(kernel, z_t, params_t, block_b)


@functools.partial(jax.jit,
                   static_argnames=("num_hidden", "in_major", "block_b"))
def ode_forward(t, z, params, *, num_hidden, in_major=False, block_b=512):
    """Drop-in layout wrapper: z (B, L), params (B, P).  Prefer emitting the
    hypernet output feature-major and calling ode_forward_t directly -- the
    params transpose here is a full extra HBM pass of the dominant tensor."""
    out_t = ode_forward_t(t, z.T, params.T, num_hidden=num_hidden,
                          in_major=in_major, block_b=block_b)
    return out_t.T


@functools.partial(jax.jit,
                   static_argnames=("num_hidden", "n_steps", "dt", "in_major",
                                    "block_b"))
def ode_euler_steps_t(z_t, params_t, *, num_hidden, n_steps, dt,
                      in_major=False, block_b=512):
    """n fused explicit-Euler steps of dz/dt = dynamics_network(z); params are
    read from HBM once per batch tile instead of once per step."""
    L, _ = z_t.shape
    P, _ = params_t.shape
    assert P == _param_count(L, num_hidden)
    kernel = functools.partial(_ode_euler_kernel, latent_dim=L,
                               num_hidden=num_hidden, in_major=in_major,
                               n_steps=n_steps, dt=dt)
    return _run(kernel, z_t, params_t, block_b)


# ----------------------------------------------------------------------------
# Pure-numpy references (torch-ordered flat params, per-sample loop)
# ----------------------------------------------------------------------------
def ode_forward_ref(z, params, latent_dim, num_hidden):
    z = np.asarray(z, dtype=np.float32)
    params = np.asarray(params, dtype=np.float32)
    B = z.shape[0]
    L, H = latent_dim, num_hidden
    out = np.zeros((B, L), dtype=np.float32)
    for b in range(B):
        p = params[b]
        i = 0
        w1 = p[i:i + H * L].reshape(H, L); i += H * L
        b1 = p[i:i + H]; i += H
        w2 = p[i:i + H * H].reshape(H, H); i += H * H
        b2 = p[i:i + H]; i += H
        w3 = p[i:i + L * H].reshape(L, H); i += L * H
        b3 = p[i:i + L]; i += L
        h = np.tanh(w1 @ z[b] + b1)
        h = np.tanh(w2 @ h + b2)
        out[b] = np.tanh(w3 @ h + b3)
    return out


def ode_euler_ref(z, params, latent_dim, num_hidden, n_steps, dt):
    z = np.asarray(z, dtype=np.float32).copy()
    for _ in range(n_steps):
        z = z + dt * ode_forward_ref(z, params, latent_dim, num_hidden)
    return z


def torch_to_in_major(params_t, latent_dim, num_hidden):
    """(P, B) torch-ordered rows -> same values, in-major rows (the layout the
    hypernet would emit after a static row permutation of its weight)."""
    p = np.asarray(params_t)
    L, H = latent_dim, num_hidden
    segs, i = [], 0
    for h_in, h_out in ((L, H), (H, H), (H, L)):
        w = p[i:i + h_in * h_out]; i += h_in * h_out
        b = p[i:i + h_out]; i += h_out
        w = w.reshape(h_out, h_in, -1).transpose(1, 0, 2).reshape(
            h_in * h_out, -1)
        segs += [w, b]
    return np.concatenate(segs, axis=0)


# ----------------------------------------------------------------------------
# Demo
# ----------------------------------------------------------------------------
if __name__ == "__main__":
    # Small config consistent with the module:
    #   cfg.layers.latent_dim = 8, cfg.layers.num_hidden = 32,
    #   cfg.layers.num_layers = 2, cfg.layers.code_dim = 16, batch = 2
    B, L, H, CODE = 2, 8, 32, 16
    P = _param_count(L, H)   # == count_params(dynamics_network) == 1608

    key = jax.random.PRNGKey(0)
    k_z, k_emb, k_hyp, k_z2, k_e2 = jax.random.split(key, 5)

    z = jax.random.normal(k_z, (B, L), dtype=jnp.float32)
    t = jnp.zeros((), dtype=jnp.float32)   # ignored by the network

    # Synthetic hypernet step (mirrors self.params = self.hypernet(embeddings)
    # with weight ~ N(0, 0.01), bias = 0), emitted feature-major (P, B).
    embeddings = jax.random.normal(k_emb, (B, CODE), dtype=jnp.float32)
    hyper_w = 0.01 * jax.random.normal(k_hyp, (P, CODE), dtype=jnp.float32)
    params_t = hyper_w @ embeddings.T                           # (P, B) f32

    # 1) f32 params, torch-ordered rows (exact layout of self.params).
    out_t = jax.block_until_ready(ode_forward_t(t, z.T, params_t,
                                                num_hidden=H))
    ref = ode_forward_ref(z, np.asarray(params_t).T, L, H)
    np.testing.assert_allclose(np.asarray(out_t).T, ref, rtol=1e-5, atol=1e-5)

    # 2) drop-in (B, L)/(B, P) layout wrapper.
    out2 = jax.block_until_ready(
        ode_forward(t, z, jnp.transpose(params_t), num_hidden=H))
    np.testing.assert_allclose(np.asarray(out2), ref, rtol=1e-5, atol=1e-5)

    # 3) larger batch (2 grid blocks, megacore-splittable) + bf16 params.
    B2 = 512
    z2 = jax.random.normal(k_z2, (B2, L), dtype=jnp.float32)
    emb2 = jax.random.normal(k_e2, (B2, CODE), dtype=jnp.float32)
    params2_t = hyper_w @ emb2.T                                # (P, B2) f32
    params2_bf16_t = params2_t.astype(jnp.bfloat16)             # half HBM bytes
    params2_rounded = np.asarray(params2_bf16_t.astype(jnp.float32))
    ref2 = ode_forward_ref(z2, params2_rounded.T, L, H)
    out3_t = jax.block_until_ready(
        ode_forward_t(t, z2.T, params2_bf16_t, num_hidden=H))
    np.testing.assert_allclose(np.asarray(out3_t).T, ref2, rtol=1e-5, atol=1e-5)

    # 4) in-major fast path (leading-axis VPU accumulation, no XLU reduces).
    params2_im_bf16_t = jnp.asarray(
        torch_to_in_major(np.asarray(params2_t), L, H)).astype(jnp.bfloat16)
    out4_t = jax.block_until_ready(
        ode_forward_t(t, z2.T, params2_im_bf16_t, num_hidden=H, in_major=True))
    np.testing.assert_allclose(np.asarray(out4_t).T, ref2, rtol=1e-5, atol=1e-5)

    # 5) fused explicit-Euler solve: params read once, reused for 4 steps.
    n_steps, dt = 4, 0.05
    out5_t = jax.block_until_ready(
        ode_euler_steps_t(z2.T, params2_im_bf16_t, num_hidden=H,
                          n_steps=n_steps, dt=dt, in_major=True))
    ref5 = ode_euler_ref(z2, params2_rounded.T, L, H, n_steps, dt)
    np.testing.assert_allclose(np.asarray(out5_t).T, ref5, rtol=1e-4, atol=1e-4)

    print("KERNEL_OK")
</pallas_src>

<mosaic_0001>
module attributes {stable_mosaic.version = 11 : i64} {
  func.func @_ode_fwd_kernel(%arg0: i32, %arg1: memref<8x2xf32, #tpu.memory_space<vmem>>, %arg2: memref<1608x2xf32, #tpu.memory_space<vmem>>, %arg3: memref<8x2xf32, #tpu.memory_space<vmem>>) attributes {dimension_semantics = [#tpu.dimension_semantics<parallel>], iteration_bounds = array<i64: 1>, scalar_prefetch = 0 : i64, scratch_operands = 0 : i64, tpu.core_type = #tpu.core_type<tc>, window_params = [{transform_indices = @transform_0, window_bounds = array<i64: 8, 2>}, {transform_indices = @transform_1, window_bounds = array<i64: 1608, 2>}, {transform_indices = @transform_2, window_bounds = array<i64: 8, 2>}]} {
    %c0 = arith.constant 0 : index
    %c0_0 = arith.constant 0 : index
    %0 = vector.load %arg2[%c0, %c0_0] : memref<1608x2xf32, #tpu.memory_space<vmem>>, vector<288x2xf32>
    %c288 = arith.constant 288 : index
    %c0_1 = arith.constant 0 : index
    %1 = vector.load %arg2[%c288, %c0_1] : memref<1608x2xf32, #tpu.memory_space<vmem>>, vector<1056x2xf32>
    %c1344 = arith.constant 1344 : index
    %c0_2 = arith.constant 0 : index
    %2 = vector.load %arg2[%c1344, %c0_2] : memref<1608x2xf32, #tpu.memory_space<vmem>>, vector<264x2xf32>
    %c0_3 = arith.constant 0 : index
    %c0_4 = arith.constant 0 : index
    %3 = vector.load %arg1[%c0_3, %c0_4] : memref<8x2xf32, #tpu.memory_space<vmem>>, vector<8x2xf32>
    %4 = vector.extract_strided_slice %0 {offsets = [256, 0], sizes = [32, 2], strides = [1, 1]} : vector<288x2xf32> to vector<32x2xf32>
    %5 = vector.extract_strided_slice %0 {offsets = [0, 0], sizes = [256, 2], strides = [1, 1]} : vector<288x2xf32> to vector<256x2xf32>
    %6 = vector.shape_cast %5 : vector<256x2xf32> to vector<32x8x2xf32>
    %7 = vector.shape_cast %3 : vector<8x2xf32> to vector<1x8x2xf32>
    %8 = vector.broadcast %7 : vector<1x8x2xf32> to vector<32x8x2xf32>
    %9 = arith.mulf %6, %8 : vector<32x8x2xf32>
    %cst = arith.constant dense<0.000000e+00> : vector<32x2xf32>
    %10 = vector.multi_reduction <add>, %9, %cst [1] : vector<32x8x2xf32> to vector<32x2xf32>
    %11 = arith.addf %10, %4 : vector<32x2xf32>
    %12 = math.tanh %11 : vector<32x2xf32>
    %13 = vector.extract_strided_slice %1 {offsets = [1024, 0], sizes = [32, 2], strides = [1, 1]} : vector<1056x2xf32> to vector<32x2xf32>
    %14 = vector.extract_strided_slice %1 {offsets = [0, 0], sizes = [1024, 2], strides = [1, 1]} : vector<1056x2xf32> to vector<1024x2xf32>
    %15 = vector.shape_cast %14 : vector<1024x2xf32> to vector<32x32x2xf32>
    %16 = vector.shape_cast %12 : vector<32x2xf32> to vector<1x32x2xf32>
    %17 = vector.broadcast %16 : vector<1x32x2xf32> to vector<32x32x2xf32>
    %18 = arith.mulf %15, %17 : vector<32x32x2xf32>
    %cst_5 = arith.constant dense<0.000000e+00> : vector<32x2xf32>
    %19 = vector.multi_reduction <add>, %18, %cst_5 [1] : vector<32x32x2xf32> to vector<32x2xf32>
    %20 = arith.addf %19, %13 : vector<32x2xf32>
    %21 = math.tanh %20 : vector<32x2xf32>
    %22 = vector.extract_strided_slice %2 {offsets = [256, 0], sizes = [8, 2], strides = [1, 1]} : vector<264x2xf32> to vector<8x2xf32>
    %23 = vector.extract_strided_slice %2 {offsets = [0, 0], sizes = [256, 2], strides = [1, 1]} : vector<264x2xf32> to vector<256x2xf32>
    %24 = vector.shape_cast %23 : vector<256x2xf32> to vector<8x32x2xf32>
    %25 = vector.shape_cast %21 : vector<32x2xf32> to vector<1x32x2xf32>
    %26 = vector.broadcast %25 : vector<1x32x2xf32> to vector<8x32x2xf32>
    %27 = arith.mulf %24, %26 : vector<8x32x2xf32>
    %cst_6 = arith.constant dense<0.000000e+00> : vector<8x2xf32>
    %28 = vector.multi_reduction <add>, %27, %cst_6 [1] : vector<8x32x2xf32> to vector<8x2xf32>
    %29 = arith.addf %28, %22 : vector<8x2xf32>
    %30 = math.tanh %29 : vector<8x2xf32>
    %c0_7 = arith.constant 0 : index
    %c0_8 = arith.constant 0 : index
    %31 = vector.load %arg3[%c0_7, %c0_8] : memref<8x2xf32, #tpu.memory_space<vmem>>, vector<8x2xf32>
    tpu.vector_store %arg3[%c0_7, %c0_8], %30 {strides = array<i32>} : memref<8x2xf32, #tpu.memory_space<vmem>>, vector<8x2xf32>,
    return
  }
  func.func @transform_0(%arg0: i32) -> (i32, i32) {
    %c0_i32 = arith.constant 0 : i32
    %c0_i32_0 = arith.constant 0 : i32
    return %c0_i32, %arg0 : i32, i32
  }
  func.func @transform_1(%arg0: i32) -> (i32, i32) {
    %c0_i32 = arith.constant 0 : i32
    %c0_i32_0 = arith.constant 0 : i32
    return %c0_i32, %arg0 : i32, i32
  }
  func.func @transform_2(%arg0: i32) -> (i32, i32) {
    %c0_i32 = arith.constant 0 : i32
    %c0_i32_0 = arith.constant 0 : i32
    return %c0_i32, %arg0 : i32, i32
  }
}

</mosaic_0001>

<llo_original>
// kernel: ode_forward_t.1
$region0: #{ode_forward_t.1}
  #allocation0 [shape = 'u32[]', space=smem, size = 0x4, offset = 0x4, fixed_abs, tag = 'smem constant byte address 0x4 - core index']
  #allocation1 [shape = 'u32[144,128]{1,0:T(1,128)}', space=vmem, size = 0x12000, scoped, tag = 'internal scratch']
  %s0 = inlined_call_operand.vmem [shape: f32[8,2], index: 0, kind: input, shape index: {}]
  %s1 = inlined_call_operand.vmem [shape: f32[1608,2], index: 1, kind: input, shape index: {}]
  %s2 = inlined_call_operand.vmem [shape: f32[8,2], index: 2, kind: output, shape index: {}]
  %s3 = sld [smem:[#allocation0]]
  $region18: #{ode_forward_t.1} parent=0
    _
  %s5 = ssub.s32 1, %s3
  %s6 = scalar_select 0, %s5, %s3
  // Predicated region
  $region2: #{ode_forward_t.1} parent=0 // pred_check
    _
  $region3: #{ode_forward_t.1} parent=0 // pred_check_branch
    %8 = sbr.rel (0) target = $region5
  $region4: #{ode_forward_t.1} parent=0 // pred_region
    _
  $region5: #{ode_forward_t.1} parent=0 // pred_fallthru
    _
  // Predicated region
  $region6: #{ode_forward_t.1} parent=0 // pred_check
    _
  $region7: #{ode_forward_t.1} parent=0 // pred_check_branch
    %10 = sbr.rel (0) target = $region9
  $region8: #{ode_forward_t.1} parent=0 // pred_region
    _
  $region9: #{ode_forward_t.1} parent=0 // pred_fallthru
    _
  %v11 = vld [vmem:[%s1] sm:$0xff]
  %v12 = vld [vmem:[%s1 + $0x8] sm:$0xff]
  %v13 = vld [vmem:[%s1 + $0x10] sm:$0xff]
  %v14 = vld [vmem:[%s1 + $0x18] sm:$0xff]
  %v15 = vld [vmem:[%s1 + $0x20] sm:$0xff]
  %v16 = vld [vmem:[%s1 + $0x28] sm:$0xff]
  %v17 = vld [vmem:[%s1 + $0x30] sm:$0xff]
  %v18 = vld [vmem:[%s1 + $0x38] sm:$0xff]
  %v19 = vld [vmem:[%s1 + $0x40] sm:$0xff]
  %v20 = vld [vmem:[%s1 + $0x48] sm:$0xff]
  %v21 = vld [vmem:[%s1 + $0x50] sm:$0xff]
  %v22 = vld [vmem:[%s1 + $0x58] sm:$0xff]
  %v23 = vld [vmem:[%s1 + $0x60] sm:$0xff]
  %v24 = vld [vmem:[%s1 + $0x68] sm:$0xff]
  %v25 = vld [vmem:[%s1 + $0x70] sm:$0xff]
  %v26 = vld [vmem:[%s1 + $0x78] sm:$0xff]
  %v27 = vld [vmem:[%s1 + $0x80] sm:$0xff]
  %v28 = vld [vmem:[%s1 + $0x88] sm:$0xff]
  %v29 = vld [vmem:[%s1 + $0x90] sm:$0xff]
  %v30 = vld [vmem:[%s1 + $0x98] sm:$0xff]
  %v31 = vld [vmem:[%s1 + $0xa0] sm:$0xff]
  %v32 = vld [vmem:[%s1 + $0xa8] sm:$0xff]
  %v33 = vld [vmem:[%s1 + $0xb0] sm:$0xff]
  %v34 = vld [vmem:[%s1 + $0xb8] sm:$0xff]
  %v35 = vld [vmem:[%s1 + $0xc0] sm:$0xff]
  %v36 = vld [vmem:[%s1 + $0xc8] sm:$0xff]
  %v37 = vld [vmem:[%s1 + $0xd0] sm:$0xff]
  %v38 = vld [vmem:[%s1 + $0xd8] sm:$0xff]
  %v39 = vld [vmem:[%s1 + $0xe0] sm:$0xff]
  %v40 = vld [vmem:[%s1 + $0xe8] sm:$0xff]
  %v41 = vld [vmem:[%s1 + $0xf0] sm:$0xff]
  %v42 = vld [vmem:[%s1 + $0xf8] sm:$0xff]
  %v43 = vld [vmem:[%s1 + $0x100] sm:$0xff]
  %v44 = vld [vmem:[%s1 + $0x108] sm:$0xff]
  %v45 = vld [vmem:[%s1 + $0x110] sm:$0xff]
  %v46 = vld [vmem:[%s1 + $0x118] sm:$0xff]
  %v47 = vld [vmem:[%s1 + $0x120] sm:$0xff]
  %v48 = vld [vmem:[%s1 + $0x128] sm:$0xff]
  %v49 = vld [vmem:[%s1 + $0x130] sm:$0xff]
  %v50 = vld [vmem:[%s1 + $0x138] sm:$0xff]
  %v51 = vld [vmem:[%s1 + $0x140] sm:$0xff]
  %v52 = vld [vmem:[%s1 + $0x148] sm:$0xff]
  %v53 = vld [vmem:[%s1 + $0x150] sm:$0xff]
  %v54 = vld [vmem:[%s1 + $0x158] sm:$0xff]
  %v55 = vld [vmem:[%s1 + $0x160] sm:$0xff]
  %v56 = vld [vmem:[%s1 + $0x168] sm:$0xff]
  %v57 = vld [vmem:[%s1 + $0x170] sm:$0xff]
  %v58 = vld [vmem:[%s1 + $0x178] sm:$0xff]
  %v59 = vld [vmem:[%s1 + $0x180] sm:$0xff]
  %v60 = vld [vmem:[%s1 + $0x188] sm:$0xff]
  %v61 = vld [vmem:[%s1 + $0x190] sm:$0xff]
  %v62 = vld [vmem:[%s1 + $0x198] sm:$0xff]
  %v63 = vld [vmem:[%s1 + $0x1a0] sm:$0xff]
  %v64 = vld [vmem:[%s1 + $0x1a8] sm:$0xff]
  %v65 = vld [vmem:[%s1 + $0x1b0] sm:$0xff]
  %v66 = vld [vmem:[%s1 + $0x1b8] sm:$0xff]
  %v67 = vld [vmem:[%s1 + $0x1c0] sm:$0xff]
  %v68 = vld [vmem:[%s1 + $0x1c8] sm:$0xff]
  %v69 = vld [vmem:[%s1 + $0x1d0] sm:$0xff]
  %v70 = vld [vmem:[%s1 + $0x1d8] sm:$0xff]
  %v71 = vld [vmem:[%s1 + $0x1e0] sm:$0xff]
  %v72 = vld [vmem:[%s1 + $0x1e8] sm:$0xff]
  %v73 = vld [vmem:[%s1 + $0x1f0] sm:$0xff]
  %v74 = vld [vmem:[%s1 + $0x1f8] sm:$0xff]
  %v75 = vld [vmem:[%s1 + $0x200] sm:$0xff]
  %v76 = vld [vmem:[%s1 + $0x208] sm:$0xff]
  %v77 = vld [vmem:[%s1 + $0x210] sm:$0xff]
  %v78 = vld [vmem:[%s1 + $0x218] sm:$0xff]
  %v79 = vld [vmem:[%s1 + $0x220] sm:$0xff]
  %v80 = vld [vmem:[%s1 + $0x228] sm:$0xff]
  %v81 = vld [vmem:[%s1 + $0x230] sm:$0xff]
  %v82 = vld [vmem:[%s1 + $0x238] sm:$0xff]
  %v83 = vld [vmem:[%s1 + $0x240] sm:$0xff]
  %v84 = vld [vmem:[%s1 + $0x248] sm:$0xff]
  %v85 = vld [vmem:[%s1 + $0x250] sm:$0xff]
  %v86 = vld [vmem:[%s1 + $0x258] sm:$0xff]
  %v87 = vld [vmem:[%s1 + $0x260] sm:$0xff]
  %v88 = vld [vmem:[%s1 + $0x268] sm:$0xff]
  %v89 = vld [vmem:[%s1 + $0x270] sm:$0xff]
  %v90 = vld [vmem:[%s1 + $0x278] sm:$0xff]
  %v91 = vld [vmem:[%s1 + $0x280] sm:$0xff]
  %v92 = vld [vmem:[%s1 + $0x288] sm:$0xff]
  %v93 = vld [vmem:[%s1 + $0x290] sm:$0xff]
  %v94 = vld [vmem:[%s1 + $0x298] sm:$0xff]
  %v95 = vld [vmem:[%s1 + $0x2a0] sm:$0xff]
  %v96 = vld [vmem:[%s1 + $0x2a8] sm:$0xff]
  %v97 = vld [vmem:[%s1 + $0x2b0] sm:$0xff]
  %v98 = vld [vmem:[%s1 + $0x2b8] sm:$0xff]
  %v99 = vld [vmem:[%s1 + $0x2c0] sm:$0xff]
  %v100 = vld [vmem:[%s1 + $0x2c8] sm:$0xff]
  %v101 = vld [vmem:[%s1 + $0x2d0] sm:$0xff]
  %v102 = vld [vmem:[%s1 + $0x2d8] sm:$0xff]
  %v103 = vld [vmem:[%s1 + $0x2e0] sm:$0xff]
  %v104 = vld [vmem:[%s1 + $0x2e8] sm:$0xff]
  %v105 = vld [vmem:[%s1 + $0x2f0] sm:$0xff]
  %v106 = vld [vmem:[%s1 + $0x2f8] sm:$0xff]
  %v107 = vld [vmem:[%s1 + $0x300] sm:$0xff]
  %v108 = vld [vmem:[%s1 + $0x308] sm:$0xff]
  %v109 = vld [vmem:[%s1 + $0x310] sm:$0xff]
  %v110 = vld [vmem:[%s1 + $0x318] sm:$0xff]
  %v111 = vld [vmem:[%s1 + $0x320] sm:$0xff]
  %v112 = vld [vmem:[%s1 + $0x328] sm:$0xff]
  %v113 = vld [vmem:[%s1 + $0x330] sm:$0xff]
  %v114 = vld [vmem:[%s1 + $0x338] sm:$0xff]
  %v115 = vld [vmem:[%s1 + $0x340] sm:$0xff]
  %v116 = vld [vmem:[%s1 + $0x348] sm:$0xff]
  %v117 = vld [vmem:[%s1 + $0x350] sm:$0xff]
  %v118 = vld [vmem:[%s1 + $0x358] sm:$0xff]
  %v119 = vld [vmem:[%s1 + $0x360] sm:$0xff]
  %v120 = vld [vmem:[%s1 + $0x368] sm:$0xff]
  %v121 = vld [vmem:[%s1 + $0x370] sm:$0xff]
  %v122 = vld [vmem:[%s1 + $0x378] sm:$0xff]
  %v123 = vld [vmem:[%s1 + $0x380] sm:$0xff]
  %v124 = vld [vmem:[%s1 + $0x388] sm:$0xff]
  %v125 = vld [vmem:[%s1 + $0x390] sm:$0xff]
  %v126 = vld [vmem:[%s1 + $0x398] sm:$0xff]
  %v127 = vld [vmem:[%s1 + $0x3a0] sm:$0xff]
  %v128 = vld [vmem:[%s1 + $0x3a8] sm:$0xff]
  %v129 = vld [vmem:[%s1 + $0x3b0] sm:$0xff]
  %v130 = vld [vmem:[%s1 + $0x3b8] sm:$0xff]
  %v131 = vld [vmem:[%s1 + $0x3c0] sm:$0xff]
  %v132 = vld [vmem:[%s1 + $0x3c8] sm:$0xff]
  %v133 = vld [vmem:[%s1 + $0x3d0] sm:$0xff]
  %v134 = vld [vmem:[%s1 + $0x3d8] sm:$0xff]
  %v135 = vld [vmem:[%s1 + $0x3e0] sm:$0xff]
  %v136 = vld [vmem:[%s1 + $0x3e8] sm:$0xff]
  %v137 = vld [vmem:[%s1 + $0x3f0] sm:$0xff]
  %v138 = vld [vmem:[%s1 + $0x3f8] sm:$0xff]
  %v139 = vld [vmem:[%s1 + $0x400] sm:$0xff]
  %v140 = vld [vmem:[%s1 + $0x408] sm:$0xff]
  %v141 = vld [vmem:[%s1 + $0x410] sm:$0xff]
  %v142 = vld [vmem:[%s1 + $0x418] sm:$0xff]
  %v143 = vld [vmem:[%s1 + $0x420] sm:$0xff]
  %v144 = vld [vmem:[%s1 + $0x428] sm:$0xff]
  %v145 = vld [vmem:[%s1 + $0x430] sm:$0xff]
  %v146 = vld [vmem:[%s1 + $0x438] sm:$0xff]
  %v147 = vld [vmem:[%s1 + $0x440] sm:$0xff]
  %v148 = vld [vmem:[%s1 + $0x448] sm:$0xff]
  %v149 = vld [vmem:[%s1 + $0x450] sm:$0xff]
  %v150 = vld [vmem:[%s1 + $0x458] sm:$0xff]
  %v151 = vld [vmem:[%s1 + $0x460] sm:$0xff]
  %v152 = vld [vmem:[%s1 + $0x468] sm:$0xff]
  %v153 = vld [vmem:[%s1 + $0x470] sm:$0xff]
  %v154 = vld [vmem:[%s1 + $0x478] sm:$0xff]
  %v155 = vld [vmem:[%s1 + $0x480] sm:$0xff]
  %v156 = vld [vmem:[%s1 + $0x488] sm:$0xff]
  %v157 = vld [vmem:[%s1 + $0x490] sm:$0xff]
  %v158 = vld [vmem:[%s1 + $0x498] sm:$0xff]
  %v159 = vld [vmem:[%s1 + $0x4a0] sm:$0xff]
  %v160 = vld [vmem:[%s1 + $0x4a8] sm:$0xff]
  %v161 = vld [vmem:[%s1 + $0x4b0] sm:$0xff]
  %v162 = vld [vmem:[%s1 + $0x4b8] sm:$0xff]
  %v163 = vld [vmem:[%s1 + $0x4c0] sm:$0xff]
  %v164 = vld [vmem:[%s1 + $0x4c8] sm:$0xff]
  %v165 = vld [vmem:[%s1 + $0x4d0] sm:$0xff]
  %v166 = vld [vmem:[%s1 + $0x4d8] sm:$0xff]
  %v167 = vld [vmem:[%s1 + $0x4e0] sm:$0xff]
  %v168 = vld [vmem:[%s1 + $0x4e8] sm:$0xff]
  %v169 = vld [vmem:[%s1 + $0x4f0] sm:$0xff]
  %v170 = vld [vmem:[%s1 + $0x4f8] sm:$0xff]
  %v171 = vld [vmem:[%s1 + $0x500] sm:$0xff]
  %v172 = vld [vmem:[%s1 + $0x508] sm:$0xff]
  %v173 = vld [vmem:[%s1 + $0x510] sm:$0xff]
  %v174 = vld [vmem:[%s1 + $0x518] sm:$0xff]
  %v175 = vld [vmem:[%s1 + $0x520] sm:$0xff]
  %v176 = vld [vmem:[%s1 + $0x528] sm:$0xff]
  %v177 = vld [vmem:[%s1 + $0x530] sm:$0xff]
  %v178 = vld [vmem:[%s1 + $0x538] sm:$0xff]
  %v179 = vld [vmem:[%s1 + $0x540] sm:$0xff]
  %v180 = vld [vmem:[%s1 + $0x548] sm:$0xff]
  %v181 = vld [vmem:[%s1 + $0x550] sm:$0xff]
  %v182 = vld [vmem:[%s1 + $0x558] sm:$0xff]
  %v183 = vld [vmem:[%s1 + $0x560] sm:$0xff]
  %v184 = vld [vmem:[%s1 + $0x568] sm:$0xff]
  %v185 = vld [vmem:[%s1 + $0x570] sm:$0xff]
  %v186 = vld [vmem:[%s1 + $0x578] sm:$0xff]
  %v187 = vld [vmem:[%s1 + $0x580] sm:$0xff]
  %v188 = vld [vmem:[%s1 + $0x588] sm:$0xff]
  %v189 = vld [vmem:[%s1 + $0x590] sm:$0xff]
  %v190 = vld [vmem:[%s1 + $0x598] sm:$0xff]
  %v191 = vld [vmem:[%s1 + $0x5a0] sm:$0xff]
  %v192 = vld [vmem:[%s1 + $0x5a8] sm:$0xff]
  %v193 = vld [vmem:[%s1 + $0x5b0] sm:$0xff]
  %v194 = vld [vmem:[%s1 + $0x5b8] sm:$0xff]
  %v195 = vld [vmem:[%s1 + $0x5c0] sm:$0xff]
  %v196 = vld [vmem:[%s1 + $0x5c8] sm:$0xff]
  %v197 = vld [vmem:[%s1 + $0x5d0] sm:$0xff]
  %v198 = vld [vmem:[%s1 + $0x5d8] sm:$0xff]
  %v199 = vld [vmem:[%s1 + $0x5e0] sm:$0xff]
  %v200 = vld [vmem:[%s1 + $0x5e8] sm:$0xff]
  %v201 = vld [vmem:[%s1 + $0x5f0] sm:$0xff]
  %v202 = vld [vmem:[%s1 + $0x5f8] sm:$0xff]
  %v203 = vld [vmem:[%s1 + $0x600] sm:$0xff]
  %v204 = vld [vmem:[%s1 + $0x608] sm:$0xff]
  %v205 = vld [vmem:[%s1 + $0x610] sm:$0xff]
  %v206 = vld [vmem:[%s1 + $0x618] sm:$0xff]
  %v207 = vld [vmem:[%s1 + $0x620] sm:$0xff]
  %v208 = vld [vmem:[%s1 + $0x628] sm:$0xff]
  %v209 = vld [vmem:[%s1 + $0x630] sm:$0xff]
  %v210 = vld [vmem:[%s1 + $0x638] sm:$0xff]
  %v211 = vld [vmem:[%s1 + $0x640] sm:$0xff]
  %v212 = vld [vmem:[%s0] sm:$0xff]
  %v213 = vmul.f32 %v11, %v212
  %v214 = vmul.f32 %v12, %v212
  %v215 = vmul.f32 %v13, %v212
  %v216 = vmul.f32 %v14, %v212
  %v217 = vmul.f32 %v15, %v212
  %v218 = vmul.f32 %v16, %v212
  %v219 = vmul.f32 %v17, %v212
  %v220 = vmul.f32 %v18, %v212
  %v221 = vmul.f32 %v19, %v212
  %v222 = vmul.f32 %v20, %v212
  %v223 = vmul.f32 %v21, %v212
  %v224 = vmul.f32 %v22, %v212
  %v225 = vmul.f32 %v23, %v212
  %v226 = vmul.f32 %v24, %v212
  %v227 = vmul.f32 %v25, %v212
  %v228 = vmul.f32 %v26, %v212
  %v229 = vmul.f32 %v27, %v212
  %v230 = vmul.f32 %v28, %v212
  %v231 = vmul.f32 %v29, %v212
  %v232 = vmul.f32 %v30, %v212
  %v233 = vmul.f32 %v31, %v212
  %v234 = vmul.f32 %v32, %v212
  %v235 = vmul.f32 %v33, %v212
  %v236 = vmul.f32 %v34, %v212
  %v237 = vmul.f32 %v35, %v212
  %v238 = vmul.f32 %v36, %v212
  %v239 = vmul.f32 %v37, %v212
  %v240 = vmul.f32 %v38, %v212
  %v241 = vmul.f32 %v39, %v212
  %v242 = vmul.f32 %v40, %v212
  %v243 = vmul.f32 %v41, %v212
  %v244 = vmul.f32 %v42, %v212
  %vm245 = vcmask 15360
  %v246 = vsel %vm245, %v213, 0.0
  %v247 = vrot.slane %v246, 4
  %v248 = vadd.f32 %v246, %v247
  %v249 = vrot.slane %v248, 2
  %v250 = vadd.f32 %v248, %v249
  %v251 = vrot.slane %v250, 1
  %v252 = vadd.f32 %v250, %v251
  %v253 = vsel %vm245, %v214, 0.0
  %v254 = vrot.slane %v253, 4
  %v255 = vadd.f32 %v253, %v254
  %v256 = vrot.slane %v255, 2
  %v257 = vadd.f32 %v255, %v256
  %v258 = vrot.slane %v257, 1
  %v259 = vadd.f32 %v257, %v258
  %v260 = vsel %vm245, %v215, 0.0
  %v261 = vrot.slane %v260, 4
  %v262 = vadd.f32 %v260, %v261
  %v263 = vrot.slane %v262, 2
  %v264 = vadd.f32 %v262, %v263
  %v265 = vrot.slane %v264, 1
  %v266 = vadd.f32 %v264, %v265
  %v267 = vsel %vm245, %v216, 0.0
  %v268 = vrot.slane %v267, 4
  %v269 = vadd.f32 %v267, %v268
  %v270 = vrot.slane %v269, 2
  %v271 = vadd.f32 %v269, %v270
  %v272 = vrot.slane %v271, 1
  %v273 = vadd.f32 %v271, %v272
  %v274 = vsel %vm245, %v217, 0.0
  %v275 = vrot.slane %v274, 4
  %v276 = vadd.f32 %v274, %v275
  %v277 = vrot.slane %v276, 2
  %v278 = vadd.f32 %v276, %v277
  %v279 = vrot.slane %v278, 1
  %v280 = vadd.f32 %v278, %v279
  %v281 = vsel %vm245, %v218, 0.0
  %v282 = vrot.slane %v281, 4
  %v283 = vadd.f32 %v281, %v282
  %v284 = vrot.slane %v283, 2
  %v285 = vadd.f32 %v283, %v284
  %v286 = vrot.slane %v285, 1
  %v287 = vadd.f32 %v285, %v286
  %v288 = vsel %vm245, %v219, 0.0
  %v289 = vrot.slane %v288, 4
  %v290 = vadd.f32 %v288, %v289
  %v291 = vrot.slane %v290, 2
  %v292 = vadd.f32 %v290, %v291
  %v293 = vrot.slane %v292, 1
  %v294 = vadd.f32 %v292, %v293
  %v295 = vsel %vm245, %v220, 0.0
  %v296 = vrot.slane %v295, 4
  %v297 = vadd.f32 %v295, %v296
  %v298 = vrot.slane %v297, 2
  %v299 = vadd.f32 %v297, %v298
  %v300 = vrot.slane %v299, 1
  %v301 = vadd.f32 %v299, %v300
  %v302 = vsel %vm245, %v221, 0.0
  %v303 = vrot.slane %v302, 4
  %v304 = vadd.f32 %v302, %v303
  %v305 = vrot.slane %v304, 2
  %v306 = vadd.f32 %v304, %v305
  %v307 = vrot.slane %v306, 1
  %v308 = vadd.f32 %v306, %v307
  %v309 = vsel %vm245, %v222, 0.0
  %v310 = vrot.slane %v309, 4
  %v311 = vadd.f32 %v309, %v310
  %v312 = vrot.slane %v311, 2
  %v313 = vadd.f32 %v311, %v312
  %v314 = vrot.slane %v313, 1
  %v315 = vadd.f32 %v313, %v314
  %v316 = vsel %vm245, %v223, 0.0
  %v317 = vrot.slane %v316, 4
  %v318 = vadd.f32 %v316, %v317
  %v319 = vrot.slane %v318, 2
  %v320 = vadd.f32 %v318, %v319
  %v321 = vrot.slane %v320, 1
  %v322 = vadd.f32 %v320, %v321
  %v323 = vsel %vm245, %v224, 0.0
  %v324 = vrot.slane %v323, 4
  %v325 = vadd.f32 %v323, %v324
  %v326 = vrot.slane %v325, 2
  %v327 = vadd.f32 %v325, %v326
  %v328 = vrot.slane %v327, 1
  %v329 = vadd.f32 %v327, %v328
  %v330 = vsel %vm245, %v225, 0.0
  %v331 = vrot.slane %v330, 4
  %v332 = vadd.f32 %v330, %v331
  %v333 = vrot.slane %v332, 2
  %v334 = vadd.f32 %v332, %v333
  %v335 = vrot.slane %v334, 1
  %v336 = vadd.f32 %v334, %v335
  %v337 = vsel %vm245, %v226, 0.0
  %v338 = vrot.slane %v337, 4
  %v339 = vadd.f32 %v337, %v338
  %v340 = vrot.slane %v339, 2
  %v341 = vadd.f32 %v339, %v340
  %v342 = vrot.slane %v341, 1
  %v343 = vadd.f32 %v341, %v342
  %v344 = vsel %vm245, %v227, 0.0
  %v345 = vrot.slane %v344, 4
  %v346 = vadd.f32 %v344, %v345
  %v347 = vrot.slane %v346, 2
  %v348 = vadd.f32 %v346, %v347
  %v349 = vrot.slane %v348, 1
  %v350 = vadd.f32 %v348, %v349
  %v351 = vsel %vm245, %v228, 0.0
  %v352 = vrot.slane %v351, 4
  %v353 = vadd.f32 %v351, %v352
  %v354 = vrot.slane %v353, 2
  %v355 = vadd.f32 %v353, %v354
  %v356 = vrot.slane %v355, 1
  %v357 = vadd.f32 %v355, %v356
  %v358 = vsel %vm245, %v229, 0.0
  %v359 = vrot.slane %v358, 4
  %v360 = vadd.f32 %v358, %v359
  %v361 = vrot.slane %v360, 2
  %v362 = vadd.f32 %v360, %v361
  %v363 = vrot.slane %v362, 1
  %v364 = vadd.f32 %v362, %v363
  %v365 = vsel %vm245, %v230, 0.0
  %v366 = vrot.slane %v365, 4
  %v367 = vadd.f32 %v365, %v366
  %v368 = vrot.slane %v367, 2
  %v369 = vadd.f32 %v367, %v368
  %v370 = vrot.slane %v369, 1
  %v371 = vadd.f32 %v369, %v370
  %v372 = vsel %vm245, %v231, 0.0
  %v373 = vrot.slane %v372, 4
  %v374 = vadd.f32 %v372, %v373
  %v375 = vrot.slane %v374, 2
  %v376 = vadd.f32 %v374, %v375
  %v377 = vrot.slane %v376, 1
  %v378 = vadd.f32 %v376, %v377
  %v379 = vsel %vm245, %v232, 0.0
  %v380 = vrot.slane %v379, 4
  %v381 = vadd.f32 %v379, %v380
  %v382 = vrot.slane %v381, 2
  %v383 = vadd.f32 %v381, %v382
  %v384 = vrot.slane %v383, 1
  %v385 = vadd.f32 %v383, %v384
  %v386 = vsel %vm245, %v233, 0.0
  %v387 = vrot.slane %v386, 4
  %v388 = vadd.f32 %v386, %v387
  %v389 = vrot.slane %v388, 2
  %v390 = vadd.f32 %v388, %v389
  %v391 = vrot.slane %v390, 1
  %v392 = vadd.f32 %v390, %v391
  %v393 = vsel %vm245, %v234, 0.0
  %v394 = vrot.slane %v393, 4
  %v395 = vadd.f32 %v393, %v394
  %v396 = vrot.slane %v395, 2
  %v397 = vadd.f32 %v395, %v396
  %v398 = vrot.slane %v397, 1
  %v399 = vadd.f32 %v397, %v398
  %v400 = vsel %vm245, %v235, 0.0
  %v401 = vrot.slane %v400, 4
  %v402 = vadd.f32 %v400, %v401
  %v403 = vrot.slane %v402, 2
  %v404 = vadd.f32 %v402, %v403
  %v405 = vrot.slane %v404, 1
  %v406 = vadd.f32 %v404, %v405
  %v407 = vsel %vm245, %v236, 0.0
  %v408 = vrot.slane %v407, 4
  %v409 = vadd.f32 %v407, %v408
  %v410 = vrot.slane %v409, 2
  %v411 = vadd.f32 %v409, %v410
  %v412 = vrot.slane %v411, 1
  %v413 = vadd.f32 %v411, %v412
  %v414 = vsel %vm245, %v237, 0.0
  %v415 = vrot.slane %v414, 4
  %v416 = vadd.f32 %v414, %v415
  %v417 = vrot.slane %v416, 2
  %v418 = vadd.f32 %v416, %v417
  %v419 = vrot.slane %v418, 1
  %v420 = vadd.f32 %v418, %v419
  %v421 = vsel %vm245, %v238, 0.0
  %v422 = vrot.slane %v421, 4
  %v423 = vadd.f32 %v421, %v422
  %v424 = vrot.slane %v423, 2
  %v425 = vadd.f32 %v423, %v424
  %v426 = vrot.slane %v425, 1
  %v427 = vadd.f32 %v425, %v426
  %v428 = vsel %vm245, %v239, 0.0
  %v429 = vrot.slane %v428, 4
  %v430 = vadd.f32 %v428, %v429
  %v431 = vrot.slane %v430, 2
  %v432 = vadd.f32 %v430, %v431
  %v433 = vrot.slane %v432, 1
  %v434 = vadd.f32 %v432, %v433
  %v435 = vsel %vm245, %v240, 0.0
  %v436 = vrot.slane %v435, 4
  %v437 = vadd.f32 %v435, %v436
  %v438 = vrot.slane %v437, 2
  %v439 = vadd.f32 %v437, %v438
  %v440 = vrot.slane %v439, 1
  %v441 = vadd.f32 %v439, %v440
  %v442 = vsel %vm245, %v241, 0.0
  %v443 = vrot.slane %v442, 4
  %v444 = vadd.f32 %v442, %v443
  %v445 = vrot.slane %v444, 2
  %v446 = vadd.f32 %v444, %v445
  %v447 = vrot.slane %v446, 1
  %v448 = vadd.f32 %v446, %v447
  %v449 = vsel %vm245, %v242, 0.0
  %v450 = vrot.slane %v449, 4
  %v451 = vadd.f32 %v449, %v450
  %v452 = vrot.slane %v451, 2
  %v453 = vadd.f32 %v451, %v452
  %v454 = vrot.slane %v453, 1
  %v455 = vadd.f32 %v453, %v454
  %v456 = vsel %vm245, %v243, 0.0
  %v457 = vrot.slane %v456, 4
  %v458 = vadd.f32 %v456, %v457
  %v459 = vrot.slane %v458, 2
  %v460 = vadd.f32 %v458, %v459
  %v461 = vrot.slane %v460, 1
  %v462 = vadd.f32 %v460, %v461
  %v463 = vsel %vm245, %v244, 0.0
  %v464 = vrot.slane %v463, 4
  %v465 = vadd.f32 %v463, %v464
  %v466 = vrot.slane %v465, 2
  %v467 = vadd.f32 %v465, %v466
  %v468 = vrot.slane %v467, 1
  %v469 = vadd.f32 %v467, %v468
  %v474 = vrot.slane %v43, 1
  %v475 = vrot.slane %v43, 2
  %v476 = vrot.slane %v43, 3
  %v477 = vrot.slane %v43, 4
  %v478 = vrot.slane %v43, 5
  %v479 = vrot.slane %v43, 6
  %v480 = vrot.slane %v43, 7
  %v481 = vrot.slane %v44, 1
  %v482 = vrot.slane %v44, 2
  %v483 = vrot.slane %v44, 3
  %v484 = vrot.slane %v44, 4
  %v485 = vrot.slane %v44, 5
  %v486 = vrot.slane %v44, 6
  %v487 = vrot.slane %v44, 7
  %v488 = vrot.slane %v45, 1
  %v489 = vrot.slane %v45, 2
  %v490 = vrot.slane %v45, 3
  %v491 = vrot.slane %v45, 4
  %v492 = vrot.slane %v45, 5
  %v493 = vrot.slane %v45, 6
  %v494 = vrot.slane %v45, 7
  %v495 = vrot.slane %v46, 1
  %v496 = vrot.slane %v46, 2
  %v497 = vrot.slane %v46, 3
  %v498 = vrot.slane %v46, 4
  %v499 = vrot.slane %v46, 5
  %v500 = vrot.slane %v46, 6
  %v501 = vrot.slane %v46, 7
  %v534 = vadd.f32 %v252, %v43
  %v535 = vadd.f32 %v259, %v474
  %v536 = vadd.f32 %v266, %v475
  %v537 = vadd.f32 %v273, %v476
  %v538 = vadd.f32 %v280, %v477
  %v539 = vadd.f32 %v287, %v478
  %v540 = vadd.f32 %v294, %v479
  %v541 = vadd.f32 %v301, %v480
  %v542 = vadd.f32 %v308, %v44
  %v543 = vadd.f32 %v315, %v481
  %v544 = vadd.f32 %v322, %v482
  %v545 = vadd.f32 %v329, %v483
  %v546 = vadd.f32 %v336, %v484
  %v547 = vadd.f32 %v343, %v485
  %v548 = vadd.f32 %v350, %v486
  %v549 = vadd.f32 %v357, %v487
  %v550 = vadd.f32 %v364, %v45
  %v551 = vadd.f32 %v371, %v488
  %v552 = vadd.f32 %v378, %v489
  %v553 = vadd.f32 %v385, %v490
  %v554 = vadd.f32 %v392, %v491
  %v555 = vadd.f32 %v399, %v492
  %v556 = vadd.f32 %v406, %v493
  %v557 = vadd.f32 %v413, %v494
  %v558 = vadd.f32 %v420, %v46
  %v559 = vadd.f32 %v427, %v495
  %v560 = vadd.f32 %v434, %v496
  %v561 = vadd.f32 %v441, %v497
  %v562 = vadd.f32 %v448, %v498
  %v563 = vadd.f32 %v455, %v499
  %v564 = vadd.f32 %v462, %v500
  %v565 = vadd.f32 %v469, %v501
  %v566 = vtanh.pop %v534
  %v567 = vtanh.pop %v535
  %v568 = vtanh.pop %v536
  %v569 = vtanh.pop %v537
  %v570 = vtanh.pop %v538
  %v571 = vtanh.pop %v539
  %v572 = vtanh.pop %v540
  %v573 = vtanh.pop %v541
  %v574 = vtanh.pop %v542
  %v575 = vtanh.pop %v543
  %v576 = vtanh.pop %v544
  %v577 = vtanh.pop %v545
  %v578 = vtanh.pop %v546
  %v579 = vtanh.pop %v547
  %v580 = vtanh.pop %v548
  %v581 = vtanh.pop %v549
  %v582 = vtanh.pop %v550
  %v583 = vtanh.pop %v551
  %v584 = vtanh.pop %v552
  %v585 = vtanh.pop %v553
  %v586 = vtanh.pop %v554
  %v587 = vtanh.pop %v555
  %v588 = vtanh.pop %v556
  %v589 = vtanh.pop %v557
  %v590 = vtanh.pop %v558
  %v591 = vtanh.pop %v559
  %v592 = vtanh.pop %v560
  %v593 = vtanh.pop %v561
  %v594 = vtanh.pop %v562
  %v595 = vtanh.pop %v563
  %v596 = vtanh.pop %v564
  %v597 = vtanh.pop %v565
  %v630 = vrot.slane %v567, 7
  %vm631 = vcmask 1041409
  %v632 = vsel %vm631, %v630, %v566
  %v633 = vrot.slane %v568, 6
  %vm634 = vcmask 1042434
  %v635 = vsel %vm634, %v633, %v632
  %v636 = vrot.slane %v569, 5
  %vm637 = vcmask 1043459
  %v638 = vsel %vm637, %v636, %v635
  %v639 = vrot.slane %v570, 4
  %vm640 = vcmask 1044484
  %v641 = vsel %vm640, %v639, %v638
  %v642 = vrot.slane %v571, 3
  %vm643 = vcmask 1045509
  %v644 = vsel %vm643, %v642, %v641
  %v645 = vrot.slane %v572, 2
  %vm646 = vcmask 1046534
  %v647 = vsel %vm646, %v645, %v644
  %v648 = vrot.slane %v573, 1
  %vm649 = vcmask 1047559
  %v650 = vsel %vm649, %v648, %v647
  %v651 = vrot.slane %v575, 7
  %v652 = vsel %vm631, %v651, %v574
  %v653 = vrot.slane %v576, 6
  %v654 = vsel %vm634, %v653, %v652
  %v655 = vrot.slane %v577, 5
  %v656 = vsel %vm637, %v655, %v654
  %v657 = vrot.slane %v578, 4
  %v658 = vsel %vm640, %v657, %v656
  %v659 = vrot.slane %v579, 3
  %v660 = vsel %vm643, %v659, %v658
  %v661 = vrot.slane %v580, 2
  %v662 = vsel %vm646, %v661, %v660
  %v663 = vrot.slane %v581, 1
  %v664 = vsel %vm649, %v663, %v662
  %v665 = vrot.slane %v583, 7
  %v666 = vsel %vm631, %v665, %v582
  %v667 = vrot.slane %v584, 6
  %v668 = vsel %vm634, %v667, %v666
  %v669 = vrot.slane %v585, 5
  %v670 = vsel %vm637, %v669, %v668
  %v671 = vrot.slane %v586, 4
  %v672 = vsel %vm640, %v671, %v670
  %v673 = vrot.slane %v587, 3
  %v674 = vsel %vm643, %v673, %v672
  %v675 = vrot.slane %v588, 2
  %v676 = vsel %vm646, %v675, %v674
  %v677 = vrot.slane %v589, 1
  %v678 = vsel %vm649, %v677, %v676
  %v679 = vrot.slane %v591, 7
  %v680 = vsel %vm631, %v679, %v590
  %v681 = vrot.slane %v592, 6
  %v682 = vsel %vm634, %v681, %v680
  %v683 = vrot.slane %v593, 5
  %v684 = vsel %vm637, %v683, %v682
  %v685 = vrot.slane %v594, 4
  %v686 = vsel %vm640, %v685, %v684
  %v687 = vrot.slane %v595, 3
  %v688 = vsel %vm643, %v687, %v686
  %v689 = vrot.slane %v596, 2
  %v690 = vsel %vm646, %v689, %v688
  %v691 = vrot.slane %v597, 1
  %v692 = vsel %vm649, %v691, %v690
  %v697 = vmul.f32 %v47, %v650
  %v698 = vmul.f32 %v48, %v664
  %v699 = vmul.f32 %v49, %v678
  %v700 = vmul.f32 %v50, %v692
  %v701 = vmul.f32 %v51, %v650
  %v702 = vmul.f32 %v52, %v664
  %v703 = vmul.f32 %v53, %v678
  %v704 = vmul.f32 %v54, %v692
  %v705 = vmul.f32 %v55, %v650
  %v706 = vmul.f32 %v56, %v664
  %v707 = vmul.f32 %v57, %v678
  %v708 = vmul.f32 %v58, %v692
  %v709 = vmul.f32 %v59, %v650
  %v710 = vmul.f32 %v60, %v664
  %v711 = vmul.f32 %v61, %v678
  %v712 = vmul.f32 %v62, %v692
  %v713 = vmul.f32 %v63, %v650
  %v714 = vmul.f32 %v64, %v664
  %v715 = vmul.f32 %v65, %v678
  %v716 = vmul.f32 %v66, %v692
  %v717 = vmul.f32 %v67, %v650
  %v718 = vmul.f32 %v68, %v664
  %v719 = vmul.f32 %v69, %v678
  %v720 = vmul.f32 %v70, %v692
  %v721 = vmul.f32 %v71, %v650
  %v722 = vmul.f32 %v72, %v664
  %v723 = vmul.f32 %v73, %v678
  %v724 = vmul.f32 %v74, %v692
  %v725 = vmul.f32 %v75, %v650
  %v726 = vmul.f32 %v76, %v664
  %v727 = vmul.f32 %v77, %v678
  %v728 = vmul.f32 %v78, %v692
  %v729 = vmul.f32 %v79, %v650
  %v730 = vmul.f32 %v80, %v664
  %v731 = vmul.f32 %v81, %v678
  %v732 = vmul.f32 %v82, %v692
  %v733 = vmul.f32 %v83, %v650
  %v734 = vmul.f32 %v84, %v664
  %v735 = vmul.f32 %v85, %v678
  %v736 = vmul.f32 %v86, %v692
  %v737 = vmul.f32 %v87, %v650
  %v738 = vmul.f32 %v88, %v664
  %v739 = vmul.f32 %v89, %v678
  %v740 = vmul.f32 %v90, %v692
  %v741 = vmul.f32 %v91, %v650
  %v742 = vmul.f32 %v92, %v664
  %v743 = vmul.f32 %v93, %v678
  %v744 = vmul.f32 %v94, %v692
  %v745 = vmul.f32 %v95, %v650
  %v746 = vmul.f32 %v96, %v664
  %v747 = vmul.f32 %v97, %v678
  %v748 = vmul.f32 %v98, %v692
  %v749 = vmul.f32 %v99, %v650
  %v750 = vmul.f32 %v100, %v664
  %v751 = vmul.f32 %v101, %v678
  %v752 = vmul.f32 %v102, %v692
  %v753 = vmul.f32 %v103, %v650
  %v754 = vmul.f32 %v104, %v664
  %v755 = vmul.f32 %v105, %v678
  %v756 = vmul.f32 %v106, %v692
  %v757 = vmul.f32 %v107, %v650
  %v758 = vmul.f32 %v108, %v664
  %v759 = vmul.f32 %v109, %v678
  %v760 = vmul.f32 %v110, %v692
  %v761 = vmul.f32 %v111, %v650
  %v762 = vmul.f32 %v112, %v664
  %v763 = vmul.f32 %v113, %v678
  %v764 = vmul.f32 %v114, %v692
  %v765 = vmul.f32 %v115, %v650
  %v766 = vmul.f32 %v116, %v664
  %v767 = vmul.f32 %v117, %v678
  %v768 = vmul.f32 %v118, %v692
  %v769 = vmul.f32 %v119, %v650
  %v770 = vmul.f32 %v120, %v664
  %v771 = vmul.f32 %v121, %v678
  %v772 = vmul.f32 %v122, %v692
  %v773 = vmul.f32 %v123, %v650
  %v774 = vmul.f32 %v124, %v664
  %v775 = vmul.f32 %v125, %v678
  %v776 = vmul.f32 %v126, %v692
  %v777 = vmul.f32 %v127, %v650
  %v778 = vmul.f32 %v128, %v664
  %v779 = vmul.f32 %v129, %v678
  %v780 = vmul.f32 %v130, %v692
  %v781 = vmul.f32 %v131, %v650
  %v782 = vmul.f32 %v132, %v664
  %v783 = vmul.f32 %v133, %v678
  %v784 = vmul.f32 %v134, %v692
  %v785 = vmul.f32 %v135, %v650
  %v786 = vmul.f32 %v136, %v664
  %v787 = vmul.f32 %v137, %v678
  %v788 = vmul.f32 %v138, %v692
  %v789 = vmul.f32 %v139, %v650
  %v790 = vmul.f32 %v140, %v664
  %v791 = vmul.f32 %v141, %v678
  %v792 = vmul.f32 %v142, %v692
  %v793 = vmul.f32 %v143, %v650
  %v794 = vmul.f32 %v144, %v664
  %v795 = vmul.f32 %v145, %v678
  %v796 = vmul.f32 %v146, %v692
  %v797 = vmul.f32 %v147, %v650
  %v798 = vmul.f32 %v148, %v664
  %v799 = vmul.f32 %v149, %v678
  %v800 = vmul.f32 %v150, %v692
  %v801 = vmul.f32 %v151, %v650
  %v802 = vmul.f32 %v152, %v664
  %v803 = vmul.f32 %v153, %v678
  %v804 = vmul.f32 %v154, %v692
  %v805 = vmul.f32 %v155, %v650
  %v806 = vmul.f32 %v156, %v664
  %v807 = vmul.f32 %v157, %v678
  %v808 = vmul.f32 %v158, %v692
  %v809 = vmul.f32 %v159, %v650
  %v810 = vmul.f32 %v160, %v664
  %v811 = vmul.f32 %v161, %v678
  %v812 = vmul.f32 %v162, %v692
  %v813 = vmul.f32 %v163, %v650
  %v814 = vmul.f32 %v164, %v664
  %v815 = vmul.f32 %v165, %v678
  %v816 = vmul.f32 %v166, %v692
  %v817 = vmul.f32 %v167, %v650
  %v818 = vmul.f32 %v168, %v664
  %v819 = vmul.f32 %v169, %v678
  %v820 = vmul.f32 %v170, %v692
  %v821 = vmul.f32 %v171, %v650
  %v822 = vmul.f32 %v172, %v664
  %v823 = vmul.f32 %v173, %v678
  %v824 = vmul.f32 %v174, %v692
  %v825 = vsel %vm245, %v697, 0.0
  %v826 = vsel %vm245, %v698, 0.0
  %v827 = vadd.f32 %v825, %v826
  %v828 = vsel %vm245, %v699, 0.0
  %v829 = vadd.f32 %v827, %v828
  %v830 = vsel %vm245, %v700, 0.0
  %v831 = vadd.f32 %v829, %v830
  %v832 = vrot.slane %v831, 4
  %v833 = vadd.f32 %v831, %v832
  %v834 = vrot.slane %v833, 2
  %v835 = vadd.f32 %v833, %v834
  %v836 = vrot.slane %v835, 1
  %v837 = vadd.f32 %v835, %v836
  %v838 = vsel %vm245, %v701, 0.0
  %v839 = vsel %vm245, %v702, 0.0
  %v840 = vadd.f32 %v838, %v839
  %v841 = vsel %vm245, %v703, 0.0
  %v842 = vadd.f32 %v840, %v841
  %v843 = vsel %vm245, %v704, 0.0
  %v844 = vadd.f32 %v842, %v843
  %v845 = vrot.slane %v844, 4
  %v846 = vadd.f32 %v844, %v845
  %v847 = vrot.slane %v846, 2
  %v848 = vadd.f32 %v846, %v847
  %v849 = vrot.slane %v848, 1
  %v850 = vadd.f32 %v848, %v849
  %v851 = vsel %vm245, %v705, 0.0
  %v852 = vsel %vm245, %v706, 0.0
  %v853 = vadd.f32 %v851, %v852
  %v854 = vsel %vm245, %v707, 0.0
  %v855 = vadd.f32 %v853, %v854
  %v856 = vsel %vm245, %v708, 0.0
  %v857 = vadd.f32 %v855, %v856
  %v858 = vrot.slane %v857, 4
  %v859 = vadd.f32 %v857, %v858
  %v860 = vrot.slane %v859, 2
  %v861 = vadd.f32 %v859, %v860
  %v862 = vrot.slane %v861, 1
  %v863 = vadd.f32 %v861, %v862
  %v864 = vsel %vm245, %v709, 0.0
  %v865 = vsel %vm245, %v710, 0.0
  %v866 = vadd.f32 %v864, %v865
  %v867 = vsel %vm245, %v711, 0.0
  %v868 = vadd.f32 %v866, %v867
  %v869 = vsel %vm245, %v712, 0.0
  %v870 = vadd.f32 %v868, %v869
  %v871 = vrot.slane %v870, 4
  %v872 = vadd.f32 %v870, %v871
  %v873 = vrot.slane %v872, 2
  %v874 = vadd.f32 %v872, %v873
  %v875 = vrot.slane %v874, 1
  %v876 = vadd.f32 %v874, %v875
  %v877 = vsel %vm245, %v713, 0.0
  %v878 = vsel %vm245, %v714, 0.0
  %v879 = vadd.f32 %v877, %v878
  %v880 = vsel %vm245, %v715, 0.0
  %v881 = vadd.f32 %v879, %v880
  %v882 = vsel %vm245, %v716, 0.0
  %v883 = vadd.f32 %v881, %v882
  %v884 = vrot.slane %v883, 4
  %v885 = vadd.f32 %v883, %v884
  %v886 = vrot.slane %v885, 2
  %v887 = vadd.f32 %v885, %v886
  %v888 = vrot.slane %v887, 1
  %v889 = vadd.f32 %v887, %v888
  %v890 = vsel %vm245, %v717, 0.0
  %v891 = vsel %vm245, %v718, 0.0
  %v892 = vadd.f32 %v890, %v891
  %v893 = vsel %vm245, %v719, 0.0
  %v894 = vadd.f32 %v892, %v893
  %v895 = vsel %vm245, %v720, 0.0
  %v896 = vadd.f32 %v894, %v895
  %v897 = vrot.slane %v896, 4
  %v898 = vadd.f32 %v896, %v897
  %v899 = vrot.slane %v898, 2
  %v900 = vadd.f32 %v898, %v899
  %v901 = vrot.slane %v900, 1
  %v902 = vadd.f32 %v900, %v901
  %v903 = vsel %vm245, %v721, 0.0
  %v904 = vsel %vm245, %v722, 0.0
  %v905 = vadd.f32 %v903, %v904
  %v906 = vsel %vm245, %v723, 0.0
  %v907 = vadd.f32 %v905, %v906
  %v908 = vsel %vm245, %v724, 0.0
  %v909 = vadd.f32 %v907, %v908
  %v910 = vrot.slane %v909, 4
  %v911 = vadd.f32 %v909, %v910
  %v912 = vrot.slane %v911, 2
  %v913 = vadd.f32 %v911, %v912
  %v914 = vrot.slane %v913, 1
  %v915 = vadd.f32 %v913, %v914
  %v916 = vsel %vm245, %v725, 0.0
  %v917 = vsel %vm245, %v726, 0.0
  %v918 = vadd.f32 %v916, %v917
  %v919 = vsel %vm245, %v727, 0.0
  %v920 = vadd.f32 %v918, %v919
  %v921 = vsel %vm245, %v728, 0.0
  %v922 = vadd.f32 %v920, %v921
  %v923 = vrot.slane %v922, 4
  %v924 = vadd.f32 %v922, %v923
  %v925 = vrot.slane %v924, 2
  %v926 = vadd.f32 %v924, %v925
  %v927 = vrot.slane %v926, 1
  %v928 = vadd.f32 %v926, %v927
  %v929 = vsel %vm245, %v729, 0.0
  %v930 = vsel %vm245, %v730, 0.0
  %v931 = vadd.f32 %v929, %v930
  %v932 = vsel %vm245, %v731, 0.0
  %v933 = vadd.f32 %v931, %v932
  %v934 = vsel %vm245, %v732, 0.0
  %v935 = vadd.f32 %v933, %v934
  %v936 = vrot.slane %v935, 4
  %v937 = vadd.f32 %v935, %v936
  %v938 = vrot.slane %v937, 2
  %v939 = vadd.f32 %v937, %v938
  %v940 = vrot.slane %v939, 1
  %v941 = vadd.f32 %v939, %v940
  %v942 = vsel %vm245, %v733, 0.0
  %v943 = vsel %vm245, %v734, 0.0
  %v944 = vadd.f32 %v942, %v943
  %v945 = vsel %vm245, %v735, 0.0
  %v946 = vadd.f32 %v944, %v945
  %v947 = vsel %vm245, %v736, 0.0
  %v948 = vadd.f32 %v946, %v947
  %v949 = vrot.slane %v948, 4
  %v950 = vadd.f32 %v948, %v949
  %v951 = vrot.slane %v950, 2
  %v952 = vadd.f32 %v950, %v951
  %v953 = vrot.slane %v952, 1
  %v954 = vadd.f32 %v952, %v953
  %v955 = vsel %vm245, %v737, 0.0
  %v956 = vsel %vm245, %v738, 0.0
  %v957 = vadd.f32 %v955, %v956
  %v958 = vsel %vm245, %v739, 0.0
  %v959 = vadd.f32 %v957, %v958
  %v960 = vsel %vm245, %v740, 0.0
  %v961 = vadd.f32 %v959, %v960
  %v962 = vrot.slane %v961, 4
  %v963 = vadd.f32 %v961, %v962
  %v964 = vrot.slane %v963, 2
  %v965 = vadd.f32 %v963, %v964
  %v966 = vrot.slane %v965, 1
  %v967 = vadd.f32 %v965, %v966
  %v968 = vsel %vm245, %v741, 0.0
  %v969 = vsel %vm245, %v742, 0.0
  %v970 = vadd.f32 %v968, %v969
  %v971 = vsel %vm245, %v743, 0.0
  %v972 = vadd.f32 %v970, %v971
  %v973 = vsel %vm245, %v744, 0.0
  %v974 = vadd.f32 %v972, %v973
  %v975 = vrot.slane %v974, 4
  %v976 = vadd.f32 %v974, %v975
  %v977 = vrot.slane %v976, 2
  %v978 = vadd.f32 %v976, %v977
  %v979 = vrot.slane %v978, 1
  %v980 = vadd.f32 %v978, %v979
  %v981 = vsel %vm245, %v745, 0.0
  %v982 = vsel %vm245, %v746, 0.0
  %v983 = vadd.f32 %v981, %v982
  %v984 = vsel %vm245, %v747, 0.0
  %v985 = vadd.f32 %v983, %v984
  %v986 = vsel %vm245, %v748, 0.0
  %v987 = vadd.f32 %v985, %v986
  %v988 = vrot.slane %v987, 4
  %v989 = vadd.f32 %v987, %v988
  %v990 = vrot.slane %v989, 2
  %v991 = vadd.f32 %v989, %v990
  %v992 = vrot.slane %v991, 1
  %v993 = vadd.f32 %v991, %v992
  %v994 = vsel %vm245, %v749, 0.0
  %v995 = vsel %vm245, %v750, 0.0
  %v996 = vadd.f32 %v994, %v995
  %v997 = vsel %vm245, %v751, 0.0
  %v998 = vadd.f32 %v996, %v997
  %v999 = vsel %vm245, %v752, 0.0
  %v1000 = vadd.f32 %v998, %v999
  %v1001 = vrot.slane %v1000, 4
  %v1002 = vadd.f32 %v1000, %v1001
  %v1003 = vrot.slane %v1002, 2
  %v1004 = vadd.f32 %v1002, %v1003
  %v1005 = vrot.slane %v1004, 1
  %v1006 = vadd.f32 %v1004, %v1005
  %v1007 = vsel %vm245, %v753, 0.0
  %v1008 = vsel %vm245, %v754, 0.0
  %v1009 = vadd.f32 %v1007, %v1008
  %v1010 = vsel %vm245, %v755, 0.0
  %v1011 = vadd.f32 %v1009, %v1010
  %v1012 = vsel %vm245, %v756, 0.0
  %v1013 = vadd.f32 %v1011, %v1012
  %v1014 = vrot.slane %v1013, 4
  %v1015 = vadd.f32 %v1013, %v1014
  %v1016 = vrot.slane %v1015, 2
  %v1017 = vadd.f32 %v1015, %v1016
  %v1018 = vrot.slane %v1017, 1
  %v1019 = vadd.f32 %v1017, %v1018
  %v1020 = vsel %vm245, %v757, 0.0
  %v1021 = vsel %vm245, %v758, 0.0
  %v1022 = vadd.f32 %v1020, %v1021
  %v1023 = vsel %vm245, %v759, 0.0
  %v1024 = vadd.f32 %v1022, %v1023
  %v1025 = vsel %vm245, %v760, 0.0
  %v1026 = vadd.f32 %v1024, %v1025
  %v1027 = vrot.slane %v1026, 4
  %v1028 = vadd.f32 %v1026, %v1027
  %v1029 = vrot.slane %v1028, 2
  %v1030 = vadd.f32 %v1028, %v1029
  %v1031 = vrot.slane %v1030, 1
  %v1032 = vadd.f32 %v1030, %v1031
  %v1033 = vsel %vm245, %v761, 0.0
  %v1034 = vsel %vm245, %v762, 0.0
  %v1035 = vadd.f32 %v1033, %v1034
  %v1036 = vsel %vm245, %v763, 0.0
  %v1037 = vadd.f32 %v1035, %v1036
  %v1038 = vsel %vm245, %v764, 0.0
  %v1039 = vadd.f32 %v1037, %v1038
  %v1040 = vrot.slane %v1039, 4
  %v1041 = vadd.f32 %v1039, %v1040
  %v1042 = vrot.slane %v1041, 2
  %v1043 = vadd.f32 %v1041, %v1042
  %v1044 = vrot.slane %v1043, 1
  %v1045 = vadd.f32 %v1043, %v1044
  %v1046 = vsel %vm245, %v765, 0.0
  %v1047 = vsel %vm245, %v766, 0.0
  %v1048 = vadd.f32 %v1046, %v1047
  %v1049 = vsel %vm245, %v767, 0.0
  %v1050 = vadd.f32 %v1048, %v1049
  %v1051 = vsel %vm245, %v768, 0.0
  %v1052 = vadd.f32 %v1050, %v1051
  %v1053 = vrot.slane %v1052, 4
  %v1054 = vadd.f32 %v1052, %v1053
  %v1055 = vrot.slane %v1054, 2
  %v1056 = vadd.f32 %v1054, %v1055
  %v1057 = vrot.slane %v1056, 1
  %v1058 = vadd.f32 %v1056, %v1057
  %v1059 = vsel %vm245, %v769, 0.0
  %v1060 = vsel %vm245, %v770, 0.0
  %v1061 = vadd.f32 %v1059, %v1060
  %v1062 = vsel %vm245, %v771, 0.0
  %v1063 = vadd.f32 %v1061, %v1062
  %v1064 = vsel %vm245, %v772, 0.0
  %v1065 = vadd.f32 %v1063, %v1064
  %v1066 = vrot.slane %v1065, 4
  %v1067 = vadd.f32 %v1065, %v1066
  %v1068 = vrot.slane %v1067, 2
  %v1069 = vadd.f32 %v1067, %v1068
  %v1070 = vrot.slane %v1069, 1
  %v1071 = vadd.f32 %v1069, %v1070
  %v1072 = vsel %vm245, %v773, 0.0
  %v1073 = vsel %vm245, %v774, 0.0
  %v1074 = vadd.f32 %v1072, %v1073
  %v1075 = vsel %vm245, %v775, 0.0
  %v1076 = vadd.f32 %v1074, %v1075
  %v1077 = vsel %vm245, %v776, 0.0
  %v1078 = vadd.f32 %v1076, %v1077
  %v1079 = vrot.slane %v1078, 4
  %v1080 = vadd.f32 %v1078, %v1079
  %v1081 = vrot.slane %v1080, 2
  %v1082 = vadd.f32 %v1080, %v1081
  %v1083 = vrot.slane %v1082, 1
  %v1084 = vadd.f32 %v1082, %v1083
  %v1085 = vsel %vm245, %v777, 0.0
  %v1086 = vsel %vm245, %v778, 0.0
  %v1087 = vadd.f32 %v1085, %v1086
  %v1088 = vsel %vm245, %v779, 0.0
  %v1089 = vadd.f32 %v1087, %v1088
  %v1090 = vsel %vm245, %v780, 0.0
  %v1091 = vadd.f32 %v1089, %v1090
  %v1092 = vrot.slane %v1091, 4
  %v1093 = vadd.f32 %v1091, %v1092
  %v1094 = vrot.slane %v1093, 2
  %v1095 = vadd.f32 %v1093, %v1094
  %v1096 = vrot.slane %v1095, 1
  %v1097 = vadd.f32 %v1095, %v1096
  %v1098 = vsel %vm245, %v781, 0.0
  %v1099 = vsel %vm245, %v782, 0.0
  %v1100 = vadd.f32 %v1098, %v1099
  %v1101 = vsel %vm245, %v783, 0.0
  %v1102 = vadd.f32 %v1100, %v1101
  %v1103 = vsel %vm245, %v784, 0.0
  %v1104 = vadd.f32 %v1102, %v1103
  %v1105 = vrot.slane %v1104, 4
  %v1106 = vadd.f32 %v1104, %v1105
  %v1107 = vrot.slane %v1106, 2
  %v1108 = vadd.f32 %v1106, %v1107
  %v1109 = vrot.slane %v1108, 1
  %v1110 = vadd.f32 %v1108, %v1109
  %v1111 = vsel %vm245, %v785, 0.0
  %v1112 = vsel %vm245, %v786, 0.0
  %v1113 = vadd.f32 %v1111, %v1112
  %v1114 = vsel %vm245, %v787, 0.0
  %v1115 = vadd.f32 %v1113, %v1114
  %v1116 = vsel %vm245, %v788, 0.0
  %v1117 = vadd.f32 %v1115, %v1116
  %v1118 = vrot.slane %v1117, 4
  %v1119 = vadd.f32 %v1117, %v1118
  %v1120 = vrot.slane %v1119, 2
  %v1121 = vadd.f32 %v1119, %v1120
  %v1122 = vrot.slane %v1121, 1
  %v1123 = vadd.f32 %v1121, %v1122
  %v1124 = vsel %vm245, %v789, 0.0
  %v1125 = vsel %vm245, %v790, 0.0
  %v1126 = vadd.f32 %v1124, %v1125
  %v1127 = vsel %vm245, %v791, 0.0
  %v1128 = vadd.f32 %v1126, %v1127
  %v1129 = vsel %vm245, %v792, 0.0
  %v1130 = vadd.f32 %v1128, %v1129
  %v1131 = vrot.slane %v1130, 4
  %v1132 = vadd.f32 %v1130, %v1131
  %v1133 = vrot.slane %v1132, 2
  %v1134 = vadd.f32 %v1132, %v1133
  %v1135 = vrot.slane %v1134, 1
  %v1136 = vadd.f32 %v1134, %v1135
  %v1137 = vsel %vm245, %v793, 0.0
  %v1138 = vsel %vm245, %v794, 0.0
  %v1139 = vadd.f32 %v1137, %v1138
  %v1140 = vsel %vm245, %v795, 0.0
  %v1141 = vadd.f32 %v1139, %v1140
  %v1142 = vsel %vm245, %v796, 0.0
  %v1143 = vadd.f32 %v1141, %v1142
  %v1144 = vrot.slane %v1143, 4
  %v1145 = vadd.f32 %v1143, %v1144
  %v1146 = vrot.slane %v1145, 2
  %v1147 = vadd.f32 %v1145, %v1146
  %v1148 = vrot.slane %v1147, 1
  %v1149 = vadd.f32 %v1147, %v1148
  %v1150 = vsel %vm245, %v797, 0.0
  %v1151 = vsel %vm245, %v798, 0.0
  %v1152 = vadd.f32 %v1150, %v1151
  %v1153 = vsel %vm245, %v799, 0.0
  %v1154 = vadd.f32 %v1152, %v1153
  %v1155 = vsel %vm245, %v800, 0.0
  %v1156 = vadd.f32 %v1154, %v1155
  %v1157 = vrot.slane %v1156, 4
  %v1158 = vadd.f32 %v1156, %v1157
  %v1159 = vrot.slane %v1158, 2
  %v1160 = vadd.f32 %v1158, %v1159
  %v1161 = vrot.slane %v1160, 1
  %v1162 = vadd.f32 %v1160, %v1161
  %v1163 = vsel %vm245, %v801, 0.0
  %v1164 = vsel %vm245, %v802, 0.0
  %v1165 = vadd.f32 %v1163, %v1164
  %v1166 = vsel %vm245, %v803, 0.0
  %v1167 = vadd.f32 %v1165, %v1166
  %v1168 = vsel %vm245, %v804, 0.0
  %v1169 = vadd.f32 %v1167, %v1168
  %v1170 = vrot.slane %v1169, 4
  %v1171 = vadd.f32 %v1169, %v1170
  %v1172 = vrot.slane %v1171, 2
  %v1173 = vadd.f32 %v1171, %v1172
  %v1174 = vrot.slane %v1173, 1
  %v1175 = vadd.f32 %v1173, %v1174
  %v1176 = vsel %vm245, %v805, 0.0
  %v1177 = vsel %vm245, %v806, 0.0
  %v1178 = vadd.f32 %v1176, %v1177
  %v1179 = vsel %vm245, %v807, 0.0
  %v1180 = vadd.f32 %v1178, %v1179
  %v1181 = vsel %vm245, %v808, 0.0
  %v1182 = vadd.f32 %v1180, %v1181
  %v1183 = vrot.slane %v1182, 4
  %v1184 = vadd.f32 %v1182, %v1183
  %v1185 = vrot.slane %v1184, 2
  %v1186 = vadd.f32 %v1184, %v1185
  %v1187 = vrot.slane %v1186, 1
  %v1188 = vadd.f32 %v1186, %v1187
  %v1189 = vsel %vm245, %v809, 0.0
  %v1190 = vsel %vm245, %v810, 0.0
  %v1191 = vadd.f32 %v1189, %v1190
  %v1192 = vsel %vm245, %v811, 0.0
  %v1193 = vadd.f32 %v1191, %v1192
  %v1194 = vsel %vm245, %v812, 0.0
  %v1195 = vadd.f32 %v1193, %v1194
  %v1196 = vrot.slane %v1195, 4
  %v1197 = vadd.f32 %v1195, %v1196
  %v1198 = vrot.slane %v1197, 2
  %v1199 = vadd.f32 %v1197, %v1198
  %v1200 = vrot.slane %v1199, 1
  %v1201 = vadd.f32 %v1199, %v1200
  %v1202 = vsel %vm245, %v813, 0.0
  %v1203 = vsel %vm245, %v814, 0.0
  %v1204 = vadd.f32 %v1202, %v1203
  %v1205 = vsel %vm245, %v815, 0.0
  %v1206 = vadd.f32 %v1204, %v1205
  %v1207 = vsel %vm245, %v816, 0.0
  %v1208 = vadd.f32 %v1206, %v1207
  %v1209 = vrot.slane %v1208, 4
  %v1210 = vadd.f32 %v1208, %v1209
  %v1211 = vrot.slane %v1210, 2
  %v1212 = vadd.f32 %v1210, %v1211
  %v1213 = vrot.slane %v1212, 1
  %v1214 = vadd.f32 %v1212, %v1213
  %v1215 = vsel %vm245, %v817, 0.0
  %v1216 = vsel %vm245, %v818, 0.0
  %v1217 = vadd.f32 %v1215, %v1216
  %v1218 = vsel %vm245, %v819, 0.0
  %v1219 = vadd.f32 %v1217, %v1218
  %v1220 = vsel %vm245, %v820, 0.0
  %v1221 = vadd.f32 %v1219, %v1220
  %v1222 = vrot.slane %v1221, 4
  %v1223 = vadd.f32 %v1221, %v1222
  %v1224 = vrot.slane %v1223, 2
  %v1225 = vadd.f32 %v1223, %v1224
  %v1226 = vrot.slane %v1225, 1
  %v1227 = vadd.f32 %v1225, %v1226
  %v1228 = vsel %vm245, %v821, 0.0
  %v1229 = vsel %vm245, %v822, 0.0
  %v1230 = vadd.f32 %v1228, %v1229
  %v1231 = vsel %vm245, %v823, 0.0
  %v1232 = vadd.f32 %v1230, %v1231
  %v1233 = vsel %vm245, %v824, 0.0
  %v1234 = vadd.f32 %v1232, %v1233
  %v1235 = vrot.slane %v1234, 4
  %v1236 = vadd.f32 %v1234, %v1235
  %v1237 = vrot.slane %v1236, 2
  %v1238 = vadd.f32 %v1236, %v1237
  %v1239 = vrot.slane %v1238, 1
  %v1240 = vadd.f32 %v1238, %v1239
  %v1245 = vrot.slane %v175, 1
  %v1246 = vrot.slane %v175, 2
  %v1247 = vrot.slane %v175, 3
  %v1248 = vrot.slane %v175, 4
  %v1249 = vrot.slane %v175, 5
  %v1250 = vrot.slane %v175, 6
  %v1251 = vrot.slane %v175, 7
  %v1252 = vrot.slane %v176, 1
  %v1253 = vrot.slane %v176, 2
  %v1254 = vrot.slane %v176, 3
  %v1255 = vrot.slane %v176, 4
  %v1256 = vrot.slane %v176, 5
  %v1257 = vrot.slane %v176, 6
  %v1258 = vrot.slane %v176, 7
  %v1259 = vrot.slane %v177, 1
  %v1260 = vrot.slane %v177, 2
  %v1261 = vrot.slane %v177, 3
  %v1262 = vrot.slane %v177, 4
  %v1263 = vrot.slane %v177, 5
  %v1264 = vrot.slane %v177, 6
  %v1265 = vrot.slane %v177, 7
  %v1266 = vrot.slane %v178, 1
  %v1267 = vrot.slane %v178, 2
  %v1268 = vrot.slane %v178, 3
  %v1269 = vrot.slane %v178, 4
  %v1270 = vrot.slane %v178, 5
  %v1271 = vrot.slane %v178, 6
  %v1272 = vrot.slane %v178, 7
  %v1305 = vadd.f32 %v837, %v175
  %v1306 = vadd.f32 %v850, %v1245
  %v1307 = vadd.f32 %v863, %v1246
  %v1308 = vadd.f32 %v876, %v1247
  %v1309 = vadd.f32 %v889, %v1248
  %v1310 = vadd.f32 %v902, %v1249
  %v1311 = vadd.f32 %v915, %v1250
  %v1312 = vadd.f32 %v928, %v1251
  %v1313 = vadd.f32 %v941, %v176
  %v1314 = vadd.f32 %v954, %v1252
  %v1315 = vadd.f32 %v967, %v1253
  %v1316 = vadd.f32 %v980, %v1254
  %v1317 = vadd.f32 %v993, %v1255
  %v1318 = vadd.f32 %v1006, %v1256
  %v1319 = vadd.f32 %v1019, %v1257
  %v1320 = vadd.f32 %v1032, %v1258
  %v1321 = vadd.f32 %v1045, %v177
  %v1322 = vadd.f32 %v1058, %v1259
  %v1323 = vadd.f32 %v1071, %v1260
  %v1324 = vadd.f32 %v1084, %v1261
  %v1325 = vadd.f32 %v1097, %v1262
  %v1326 = vadd.f32 %v1110, %v1263
  %v1327 = vadd.f32 %v1123, %v1264
  %v1328 = vadd.f32 %v1136, %v1265
  %v1329 = vadd.f32 %v1149, %v178
  %v1330 = vadd.f32 %v1162, %v1266
  %v1331 = vadd.f32 %v1175, %v1267
  %v1332 = vadd.f32 %v1188, %v1268
  %v1333 = vadd.f32 %v1201, %v1269
  %v1334 = vadd.f32 %v1214, %v1270
  %v1335 = vadd.f32 %v1227, %v1271
  %v1336 = vadd.f32 %v1240, %v1272
  %v1337 = vtanh.pop %v1305
  %v1338 = vtanh.pop %v1306
  %v1339 = vtanh.pop %v1307
  %v1340 = vtanh.pop %v1308
  %v1341 = vtanh.pop %v1309
  %v1342 = vtanh.pop %v1310
  %v1343 = vtanh.pop %v1311
  %v1344 = vtanh.pop %v1312
  %v1345 = vtanh.pop %v1313
  %v1346 = vtanh.pop %v1314
  %v1347 = vtanh.pop %v1315
  %v1348 = vtanh.pop %v1316
  %v1349 = vtanh.pop %v1317
  %v1350 = vtanh.pop %v1318
  %v1351 = vtanh.pop %v1319
  %v1352 = vtanh.pop %v1320
  %v1353 = vtanh.pop %v1321
  %v1354 = vtanh.pop %v1322
  %v1355 = vtanh.pop %v1323
  %v1356 = vtanh.pop %v1324
  %v1357 = vtanh.pop %v1325
  %v1358 = vtanh.pop %v1326
  %v1359 = vtanh.pop %v1327
  %v1360 = vtanh.pop %v1328
  %v1361 = vtanh.pop %v1329
  %v1362 = vtanh.pop %v1330
  %v1363 = vtanh.pop %v1331
  %v1364 = vtanh.pop %v1332
  %v1365 = vtanh.pop %v1333
  %v1366 = vtanh.pop %v1334
  %v1367 = vtanh.pop %v1335
  %v1368 = vtanh.pop %v1336
  %v1401 = vrot.slane %v1338, 7
  %v1402 = vsel %vm631, %v1401, %v1337
  %v1403 = vrot.slane %v1339, 6
  %v1404 = vsel %vm634, %v1403, %v1402
  %v1405 = vrot.slane %v1340, 5
  %v1406 = vsel %vm637, %v1405, %v1404
  %v1407 = vrot.slane %v1341, 4
  %v1408 = vsel %vm640, %v1407, %v1406
  %v1409 = vrot.slane %v1342, 3
  %v1410 = vsel %vm643, %v1409, %v1408
  %v1411 = vrot.slane %v1343, 2
  %v1412 = vsel %vm646, %v1411, %v1410
  %v1413 = vrot.slane %v1344, 1
  %v1414 = vsel %vm649, %v1413, %v1412
  %v1415 = vrot.slane %v1346, 7
  %v1416 = vsel %vm631, %v1415, %v1345
  %v1417 = vrot.slane %v1347, 6
  %v1418 = vsel %vm634, %v1417, %v1416
  %v1419 = vrot.slane %v1348, 5
  %v1420 = vsel %vm637, %v1419, %v1418
  %v1421 = vrot.slane %v1349, 4
  %v1422 = vsel %vm640, %v1421, %v1420
  %v1423 = vrot.slane %v1350, 3
  %v1424 = vsel %vm643, %v1423, %v1422
  %v1425 = vrot.slane %v1351, 2
  %v1426 = vsel %vm646, %v1425, %v1424
  %v1427 = vrot.slane %v1352, 1
  %v1428 = vsel %vm649, %v1427, %v1426
  %v1429 = vrot.slane %v1354, 7
  %v1430 = vsel %vm631, %v1429, %v1353
  %v1431 = vrot.slane %v1355, 6
  %v1432 = vsel %vm634, %v1431, %v1430
  %v1433 = vrot.slane %v1356, 5
  %v1434 = vsel %vm637, %v1433, %v1432
  %v1435 = vrot.slane %v1357, 4
  %v1436 = vsel %vm640, %v1435, %v1434
  %v1437 = vrot.slane %v1358, 3
  %v1438 = vsel %vm643, %v1437, %v1436
  %v1439 = vrot.slane %v1359, 2
  %v1440 = vsel %vm646, %v1439, %v1438
  %v1441 = vrot.slane %v1360, 1
  %v1442 = vsel %vm649, %v1441, %v1440
  %v1443 = vrot.slane %v1362, 7
  %v1444 = vsel %vm631, %v1443, %v1361
  %v1445 = vrot.slane %v1363, 6
  %v1446 = vsel %vm634, %v1445, %v1444
  %v1447 = vrot.slane %v1364, 5
  %v1448 = vsel %vm637, %v1447, %v1446
  %v1449 = vrot.slane %v1365, 4
  %v1450 = vsel %vm640, %v1449, %v1448
  %v1451 = vrot.slane %v1366, 3
  %v1452 = vsel %vm643, %v1451, %v1450
  %v1453 = vrot.slane %v1367, 2
  %v1454 = vsel %vm646, %v1453, %v1452
  %v1455 = vrot.slane %v1368, 1
  %v1456 = vsel %vm649, %v1455, %v1454
  %v1461 = vmul.f32 %v179, %v1414
  %v1462 = vmul.f32 %v180, %v1428
  %v1463 = vmul.f32 %v181, %v1442
  %v1464 = vmul.f32 %v182, %v1456
  %v1465 = vmul.f32 %v183, %v1414
  %v1466 = vmul.f32 %v184, %v1428
  %v1467 = vmul.f32 %v185, %v1442
  %v1468 = vmul.f32 %v186, %v1456
  %v1469 = vmul.f32 %v187, %v1414
  %v1470 = vmul.f32 %v188, %v1428
  %v1471 = vmul.f32 %v189, %v1442
  %v1472 = vmul.f32 %v190, %v1456
  %v1473 = vmul.f32 %v191, %v1414
  %v1474 = vmul.f32 %v192, %v1428
  %v1475 = vmul.f32 %v193, %v1442
  %v1476 = vmul.f32 %v194, %v1456
  %v1477 = vmul.f32 %v195, %v1414
  %v1478 = vmul.f32 %v196, %v1428
  %v1479 = vmul.f32 %v197, %v1442
  %v1480 = vmul.f32 %v198, %v1456
  %v1481 = vmul.f32 %v199, %v1414
  %v1482 = vmul.f32 %v200, %v1428
  %v1483 = vmul.f32 %v201, %v1442
  %v1484 = vmul.f32 %v202, %v1456
  %v1485 = vmul.f32 %v203, %v1414
  %v1486 = vmul.f32 %v204, %v1428
  %v1487 = vmul.f32 %v205, %v1442
  %v1488 = vmul.f32 %v206, %v1456
  %v1489 = vmul.f32 %v207, %v1414
  %v1490 = vmul.f32 %v208, %v1428
  %v1491 = vmul.f32 %v209, %v1442
  %v1492 = vmul.f32 %v210, %v1456
  %v1493 = vsel %vm245, %v1461, 0.0
  %v1494 = vsel %vm245, %v1462, 0.0
  %v1495 = vadd.f32 %v1493, %v1494
  %v1496 = vsel %vm245, %v1463, 0.0
  %v1497 = vadd.f32 %v1495, %v1496
  %v1498 = vsel %vm245, %v1464, 0.0
  %v1499 = vadd.f32 %v1497, %v1498
  %v1500 = vrot.slane %v1499, 4
  %v1501 = vadd.f32 %v1499, %v1500
  %v1502 = vrot.slane %v1501, 2
  %v1503 = vadd.f32 %v1501, %v1502
  %v1504 = vrot.slane %v1503, 1
  %v1505 = vadd.f32 %v1503, %v1504
  %v1506 = vsel %vm245, %v1465, 0.0
  %v1507 = vsel %vm245, %v1466, 0.0
  %v1508 = vadd.f32 %v1506, %v1507
  %v1509 = vsel %vm245, %v1467, 0.0
  %v1510 = vadd.f32 %v1508, %v1509
  %v1511 = vsel %vm245, %v1468, 0.0
  %v1512 = vadd.f32 %v1510, %v1511
  %v1513 = vrot.slane %v1512, 4
  %v1514 = vadd.f32 %v1512, %v1513
  %v1515 = vrot.slane %v1514, 2
  %v1516 = vadd.f32 %v1514, %v1515
  %v1517 = vrot.slane %v1516, 1
  %v1518 = vadd.f32 %v1516, %v1517
  %v1519 = vsel %vm245, %v1469, 0.0
  %v1520 = vsel %vm245, %v1470, 0.0
  %v1521 = vadd.f32 %v1519, %v1520
  %v1522 = vsel %vm245, %v1471, 0.0
  %v1523 = vadd.f32 %v1521, %v1522
  %v1524 = vsel %vm245, %v1472, 0.0
  %v1525 = vadd.f32 %v1523, %v1524
  %v1526 = vrot.slane %v1525, 4
  %v1527 = vadd.f32 %v1525, %v1526
  %v1528 = vrot.slane %v1527, 2
  %v1529 = vadd.f32 %v1527, %v1528
  %v1530 = vrot.slane %v1529, 1
  %v1531 = vadd.f32 %v1529, %v1530
  %v1532 = vsel %vm245, %v1473, 0.0
  %v1533 = vsel %vm245, %v1474, 0.0
  %v1534 = vadd.f32 %v1532, %v1533
  %v1535 = vsel %vm245, %v1475, 0.0
  %v1536 = vadd.f32 %v1534, %v1535
  %v1537 = vsel %vm245, %v1476, 0.0
  %v1538 = vadd.f32 %v1536, %v1537
  %v1539 = vrot.slane %v1538, 4
  %v1540 = vadd.f32 %v1538, %v1539
  %v1541 = vrot.slane %v1540, 2
  %v1542 = vadd.f32 %v1540, %v1541
  %v1543 = vrot.slane %v1542, 1
  %v1544 = vadd.f32 %v1542, %v1543
  %v1545 = vsel %vm245, %v1477, 0.0
  %v1546 = vsel %vm245, %v1478, 0.0
  %v1547 = vadd.f32 %v1545, %v1546
  %v1548 = vsel %vm245, %v1479, 0.0
  %v1549 = vadd.f32 %v1547, %v1548
  %v1550 = vsel %vm245, %v1480, 0.0
  %v1551 = vadd.f32 %v1549, %v1550
  %v1552 = vrot.slane %v1551, 4
  %v1553 = vadd.f32 %v1551, %v1552
  %v1554 = vrot.slane %v1553, 2
  %v1555 = vadd.f32 %v1553, %v1554
  %v1556 = vrot.slane %v1555, 1
  %v1557 = vadd.f32 %v1555, %v1556
  %v1558 = vsel %vm245, %v1481, 0.0
  %v1559 = vsel %vm245, %v1482, 0.0
  %v1560 = vadd.f32 %v1558, %v1559
  %v1561 = vsel %vm245, %v1483, 0.0
  %v1562 = vadd.f32 %v1560, %v1561
  %v1563 = vsel %vm245, %v1484, 0.0
  %v1564 = vadd.f32 %v1562, %v1563
  %v1565 = vrot.slane %v1564, 4
  %v1566 = vadd.f32 %v1564, %v1565
  %v1567 = vrot.slane %v1566, 2
  %v1568 = vadd.f32 %v1566, %v1567
  %v1569 = vrot.slane %v1568, 1
  %v1570 = vadd.f32 %v1568, %v1569
  %v1571 = vsel %vm245, %v1485, 0.0
  %v1572 = vsel %vm245, %v1486, 0.0
  %v1573 = vadd.f32 %v1571, %v1572
  %v1574 = vsel %vm245, %v1487, 0.0
  %v1575 = vadd.f32 %v1573, %v1574
  %v1576 = vsel %vm245, %v1488, 0.0
  %v1577 = vadd.f32 %v1575, %v1576
  %v1578 = vrot.slane %v1577, 4
  %v1579 = vadd.f32 %v1577, %v1578
  %v1580 = vrot.slane %v1579, 2
  %v1581 = vadd.f32 %v1579, %v1580
  %v1582 = vrot.slane %v1581, 1
  %v1583 = vadd.f32 %v1581, %v1582
  %v1584 = vsel %vm245, %v1489, 0.0
  %v1585 = vsel %vm245, %v1490, 0.0
  %v1586 = vadd.f32 %v1584, %v1585
  %v1587 = vsel %vm245, %v1491, 0.0
  %v1588 = vadd.f32 %v1586, %v1587
  %v1589 = vsel %vm245, %v1492, 0.0
  %v1590 = vadd.f32 %v1588, %v1589
  %v1591 = vrot.slane %v1590, 4
  %v1592 = vadd.f32 %v1590, %v1591
  %v1593 = vrot.slane %v1592, 2
  %v1594 = vadd.f32 %v1592, %v1593
  %v1595 = vrot.slane %v1594, 1
  %v1596 = vadd.f32 %v1594, %v1595
  %v1598 = vrot.slane %v211, 1
  %v1599 = vrot.slane %v211, 2
  %v1600 = vrot.slane %v211, 3
  %v1601 = vrot.slane %v211, 4
  %v1602 = vrot.slane %v211, 5
  %v1603 = vrot.slane %v211, 6
  %v1604 = vrot.slane %v211, 7
  %v1613 = vadd.f32 %v1505, %v211
  %v1614 = vadd.f32 %v1518, %v1598
  %v1615 = vadd.f32 %v1531, %v1599
  %v1616 = vadd.f32 %v1544, %v1600
  %v1617 = vadd.f32 %v1557, %v1601
  %v1618 = vadd.f32 %v1570, %v1602
  %v1619 = vadd.f32 %v1583, %v1603
  %v1620 = vadd.f32 %v1596, %v1604
  %v1621 = vtanh.pop %v1613
  %v1622 = vtanh.pop %v1614
  %v1623 = vtanh.pop %v1615
  %v1624 = vtanh.pop %v1616
  %v1625 = vtanh.pop %v1617
  %v1626 = vtanh.pop %v1618
  %v1627 = vtanh.pop %v1619
  %v1628 = vtanh.pop %v1620
  %v1637 = vrot.slane %v1622, 7
  %v1638 = vsel %vm631, %v1637, %v1621
  %v1639 = vrot.slane %v1623, 6
  %v1640 = vsel %vm634, %v1639, %v1638
  %v1641 = vrot.slane %v1624, 5
  %v1642 = vsel %vm637, %v1641, %v1640
  %v1643 = vrot.slane %v1625, 4
  %v1644 = vsel %vm640, %v1643, %v1642
  %v1645 = vrot.slane %v1626, 3
  %v1646 = vsel %vm643, %v1645, %v1644
  %v1647 = vrot.slane %v1627, 2
  %v1648 = vsel %vm646, %v1647, %v1646
  %v1649 = vrot.slane %v1628, 1
  %v1650 = vsel %vm649, %v1649, %v1648
  %1652 = vst.msk [vmem:[%s2] sm:$0xff] %vm245, %v1650
  // Predicated region
  $region10: #{ode_forward_t.1} parent=0 // pred_check
    _
  $region11: #{ode_forward_t.1} parent=0 // pred_check_branch
    %1654 = sbr.rel (0) target = $region13
  $region12: #{ode_forward_t.1} parent=0 // pred_region
    _
  $region13: #{ode_forward_t.1} parent=0 // pred_fallthru
    _
  // Predicated region
  $region14: #{ode_forward_t.1} parent=0 // pred_check
    _
  $region15: #{ode_forward_t.1} parent=0 // pred_check_branch
    %1656 = sbr.rel (0) target = $region17
  $region16: #{ode_forward_t.1} parent=0 // pred_region
    _
  $region17: #{ode_forward_t.1} parent=0 // pred_fallthru
    _

</llo_original>
